<compile_context>
chip_gen: v5e
topology: v5e:2x2
jax: 0.10.0
libtpu: 0.0.40
codegen_flags: <defaults>
</compile_context>

<pallas_src>
import functools

import jax
import jax.numpy as jnp
from jax import lax
from jax.experimental import pallas as pl
from jax.experimental.pallas import tpu as pltpu

LANE = 128
MAX_TILE_ROWS = 4096                 # (4096, 128) f32 tile = 2 MiB / stream / buffer
SMALL_NUMEL = 64 * 1024              # below this, plain jnp (XLA fusion) wins
VMEM_LIMIT_BYTES = 40 * 1024 * 1024  # worst case 4 streams x 2 bufs x 2 MiB = 16 MiB


def _round_up(x, m):
    return ((x + m - 1) // m) * m


def _smooth_l1_f32(pred, tgt, beta):
    # Upcast inside the kernel; VPU work hides under the DMA.
    p = pred.astype(jnp.float32)
    t = tgt.astype(jnp.float32)
    # Reference: target[isnan(target)] = 0
    t = jnp.where(jnp.isnan(t), jnp.float32(0.0), t)
    diff = jnp.abs(p - t)
    half_over_beta = jnp.float32(0.5 / beta)   # hoisted; no per-element divide
    half_beta = jnp.float32(0.5 * beta)
    return jnp.where(diff < jnp.float32(beta),
                     diff * diff * half_over_beta,
                     diff - half_beta)
    # TODO(synk): the reference also host-prints/asserts when *pred* contains
    # NaN; that data-dependent host-side debug path has no Pallas equivalent.


def _elementwise_kernel(*refs, beta, loss_weight, has_weight):
    if has_weight:
        pred_ref, tgt_ref, w_ref, out_ref = refs
    else:
        pred_ref, tgt_ref, out_ref = refs
        w_ref = None
    loss = _smooth_l1_f32(pred_ref[...], tgt_ref[...], beta)
    if w_ref is not None:
        loss = loss * w_ref[...].astype(jnp.float32)
    if loss_weight != 1.0:
        loss = loss * jnp.float32(loss_weight)
    out_ref[...] = loss.astype(out_ref.dtype)


def _partial_sum_kernel(*refs, beta, has_weight, tile_rows, total_rows):
    # One (8, LANE) f32 partial per grid step.  Grid axis is fully "parallel"
    # (no carried accumulator), so both TensorCores are used on v7x.
    if has_weight:
        pred_ref, tgt_ref, w_ref, out_ref = refs
    else:
        pred_ref, tgt_ref, out_ref = refs
        w_ref = None
    loss = _smooth_l1_f32(pred_ref[...], tgt_ref[...], beta)
    if w_ref is not None:
        loss = loss * w_ref[...].astype(jnp.float32)
    if total_rows % tile_rows != 0:
        # Last block is partial: rows past total_rows hold stale VMEM data.
        # Static guard -> zero cost on exactly-tiled shapes.
        row = (pl.program_id(0) * tile_rows
               + lax.broadcasted_iota(jnp.int32, loss.shape, 0))
        loss = jnp.where(row < total_rows, loss, jnp.float32(0.0))
    # Fold (tile_rows, LANE) -> (8, LANE) with pure VPU adds.
    out_ref[...] = loss.reshape(-1, 8, LANE).sum(axis=0)


def _jnp_smooth_l1_loss(pred, target, weight, beta, reduction, avg_factor,
                        loss_weight):
    loss = _smooth_l1_f32(pred, target, beta)
    if weight is not None:
        loss = loss * weight.astype(jnp.float32)
    if reduction == "none":
        return (jnp.float32(loss_weight) * loss).astype(pred.dtype)
    total = jnp.sum(loss)
    if reduction == "mean":
        denom = (jnp.float32(avg_factor) if avg_factor is not None
                 else jnp.float32(pred.size))
        total = total / denom
    return jnp.float32(loss_weight) * total


def smooth_l1_loss_pallas(pred, target, weight=None, *, beta=1.0,
                          reduction="mean", avg_factor=None, loss_weight=1.0,
                          min_pallas_numel=SMALL_NUMEL):
    assert beta > 0
    if reduction not in ("none", "mean", "sum"):
        raise ValueError(f"bad reduction {reduction!r}")
    if avg_factor is not None and reduction == "sum":
        # mmdet weight_reduce_loss semantics
        raise ValueError('avg_factor can not be used with reduction="sum"')
    assert pred.shape == target.shape
    orig_shape = pred.shape
    numel = int(pred.size)
    if numel == 0:
        if reduction == "none":
            return jnp.zeros(orig_shape, pred.dtype)
        return jnp.float32(0.0)

    has_weight = weight is not None
    if has_weight:
        assert weight.shape == orig_shape

    # Tiny-input fast path: kernel launch + plumbing would dominate.
    if numel < min_pallas_numel:
        return _jnp_smooth_l1_loss(pred, target, weight, float(beta),
                                   reduction, avg_factor, float(loss_weight))

    rows = pl.cdiv(numel, LANE)
    aligned = (rows * LANE == numel)

    def to_2d(x):
        flat = x.reshape(-1)                       # free bitcast view
        if not aligned:
            # < LANE zeros of padding: zero pred/target/weight give exactly
            # zero loss, so reductions are unaffected.
            flat = jnp.pad(flat, (0, rows * LANE - numel))
        return flat.reshape(rows, LANE)

    inputs = [to_2d(pred), to_2d(target)]
    if has_weight:
        inputs.append(to_2d(weight))

    # Balanced tiling: big tiles for overhead amortization, no padding to a
    # block multiple (the last block may be partial).
    n_blocks = pl.cdiv(rows, MAX_TILE_ROWS)
    tile_rows = min(_round_up(pl.cdiv(rows, n_blocks), 8), MAX_TILE_ROWS)
    total_blocks = pl.cdiv(rows, tile_rows)

    compiler_params = pltpu.CompilerParams(
        dimension_semantics=("parallel",),
        vmem_limit_bytes=VMEM_LIMIT_BYTES)

    if reduction == "none":
        out2d = pl.pallas_call(
            functools.partial(_elementwise_kernel, beta=float(beta),
                              loss_weight=float(loss_weight),
                              has_weight=has_weight),
            out_shape=jax.ShapeDtypeStruct((rows, LANE), pred.dtype),
            grid_spec=pltpu.PrefetchScalarGridSpec(
                num_scalar_prefetch=0,
                grid=(total_blocks,),
                in_specs=[pl.BlockSpec((tile_rows, LANE), lambda i: (i, 0))
                          ] * len(inputs),
                out_specs=pl.BlockSpec((tile_rows, LANE), lambda i: (i, 0)),
            ),
            compiler_params=compiler_params,
        )(*inputs)
        flat = out2d.reshape(-1)
        if not aligned:
            flat = flat[:numel]
        return flat.reshape(orig_shape)

    # 'mean' / 'sum': per-block (8, LANE) f32 partials, reduced outside.
    partials = pl.pallas_call(
        functools.partial(_partial_sum_kernel, beta=float(beta),
                          has_weight=has_weight, tile_rows=tile_rows,
                          total_rows=rows),
        out_shape=jax.ShapeDtypeStruct((total_blocks * 8, LANE), jnp.float32),
        grid_spec=pltpu.PrefetchScalarGridSpec(
            num_scalar_prefetch=0,
            grid=(total_blocks,),
            in_specs=[pl.BlockSpec((tile_rows, LANE), lambda i: (i, 0))
                      ] * len(inputs),
            out_specs=pl.BlockSpec((8, LANE), lambda i: (i, 0)),
        ),
        compiler_params=compiler_params,
    )(*inputs)
    total = jnp.sum(partials)

    if reduction == "mean":
        denom = (jnp.float32(avg_factor) if avg_factor is not None
                 else jnp.float32(numel))
        total = total / denom
    return jnp.float32(loss_weight) * total


class SmoothL1LossAnalyse:
    """Mirror of the PyTorch module's forward signature."""

    def __init__(self, beta=1.0, reduction="mean", loss_weight=1.0):
        self.beta = beta
        self.reduction = reduction
        self.loss_weight = loss_weight

    def __call__(self, pred, target, weight=None, avg_factor=None,
                 reduction_override=None, **kwargs):
        assert reduction_override in (None, "none", "mean", "sum")
        reduction = reduction_override if reduction_override else self.reduction
        return smooth_l1_loss_pallas(pred, target, weight, beta=self.beta,
                                     reduction=reduction, avg_factor=avg_factor,
                                     loss_weight=self.loss_weight)


def _reference(pred, target, weight, beta, reduction, avg_factor, loss_weight):
    t = jnp.where(jnp.isnan(target), 0.0, target)
    diff = jnp.abs(pred - t)
    loss = jnp.where(diff < beta, 0.5 * diff * diff / beta, diff - 0.5 * beta)
    if weight is not None:
        loss = loss * weight
    if reduction == "none":
        return loss_weight * loss
    if reduction == "sum":
        return loss_weight * jnp.sum(loss)
    denom = avg_factor if avg_factor is not None else loss.size
    return loss_weight * jnp.sum(loss) / denom


if __name__ == "__main__":
    key = jax.random.PRNGKey(0)
    k1, k2, k3, k4, k5, k6 = jax.random.split(key, 6)
    beta = 1.0

    # ---- small shape (typical loss-head size): jnp fast path ----
    shape_s = (2, 4, 16, 16)
    pred_s = jax.random.normal(k1, shape_s, jnp.float32)
    target_s = jax.random.normal(k2, shape_s, jnp.float32)
    target_s = target_s.at[0, 0, 0, 0].set(jnp.nan)   # exercise NaN-target path
    weight_s = jax.random.uniform(k3, shape_s, jnp.float32)

    loss_mod = SmoothL1LossAnalyse(beta=beta, reduction="mean", loss_weight=1.0)
    out = jax.block_until_ready(loss_mod(pred_s, target_s))
    ref = _reference(pred_s, target_s, None, beta, "mean", None, 1.0)
    assert jnp.allclose(out, ref, rtol=1e-5, atol=1e-5)

    out = jax.block_until_ready(
        smooth_l1_loss_pallas(pred_s, target_s, weight_s, beta=beta,
                              reduction="mean", avg_factor=100.0,
                              loss_weight=2.0))
    ref = _reference(pred_s, target_s, weight_s, beta, "mean", 100.0, 2.0)
    assert jnp.allclose(out, ref, rtol=1e-5, atol=1e-5)

    # ---- larger 128-aligned shape: Pallas kernel, zero-copy reshape,
    #      partial last block exercised (rows = 1105 not a tile multiple) ----
    shape_l = (2, 4, 136, 130)     # numel = 141440 = 1105 * 128
    pred_l = jax.random.normal(k4, shape_l, jnp.float32)
    target_l = jax.random.normal(k5, shape_l, jnp.float32)
    target_l = target_l.at[0, 1, 2, 3].set(jnp.nan)
    weight_l = jax.random.uniform(k6, shape_l, jnp.float32)

    out = jax.block_until_ready(
        smooth_l1_loss_pallas(pred_l, target_l, beta=beta, reduction="mean",
                              min_pallas_numel=0))
    ref = _reference(pred_l, target_l, None, beta, "mean", None, 1.0)
    assert jnp.allclose(out, ref, rtol=1e-4, atol=1e-5)

    out = jax.block_until_ready(
        smooth_l1_loss_pallas(pred_l, target_l, weight_l, beta=beta,
                              reduction="sum", loss_weight=1.5,
                              min_pallas_numel=0))
    ref = _reference(pred_l, target_l, weight_l, beta, "sum", None, 1.5)
    assert jnp.allclose(out, ref, rtol=1e-4, atol=1e-3)

    out = jax.block_until_ready(
        smooth_l1_loss_pallas(pred_l, target_l, weight_l, beta=beta,
                              reduction="none", loss_weight=2.0,
                              min_pallas_numel=0))
    ref = _reference(pred_l, target_l, weight_l, beta, "none", None, 2.0)
    assert out.shape == shape_l
    assert jnp.allclose(out, ref, rtol=1e-5, atol=1e-5)

    # ---- unaligned numel: pad-to-LANE path through the kernel ----
    shape_u = (3, 7, 25, 19)       # numel = 9975, not a multiple of 128
    pred_u = jax.random.normal(k1, shape_u, jnp.float32)
    target_u = jax.random.normal(k2, shape_u, jnp.float32)
    weight_u = jax.random.uniform(k3, shape_u, jnp.float32)

    out = jax.block_until_ready(
        smooth_l1_loss_pallas(pred_u, target_u, weight_u, beta=beta,
                              reduction="sum", min_pallas_numel=0))
    ref = _reference(pred_u, target_u, weight_u, beta, "sum", None, 1.0)
    assert jnp.allclose(out, ref, rtol=1e-4, atol=1e-3)

    out = jax.block_until_ready(
        smooth_l1_loss_pallas(pred_u, target_u, beta=beta, reduction="none",
                              min_pallas_numel=0))
    ref = _reference(pred_u, target_u, None, beta, "none", None, 1.0)
    assert out.shape == shape_u
    assert jnp.allclose(out, ref, rtol=1e-5, atol=1e-5)

    # ---- avg_factor with reduction='sum' must raise (mmdet semantics) ----
    try:
        smooth_l1_loss_pallas(pred_s, target_s, reduction="sum",
                              avg_factor=10.0)
        raise AssertionError("expected ValueError for avg_factor + sum")
    except ValueError:
        pass

    print("KERNEL_OK")
</pallas_src>

<mosaic_0001>
module attributes {stable_mosaic.version = 11 : i64} {
  func.func @_partial_sum_kernel(%arg0: i32, %arg1: memref<1112x128xf32, #tpu.memory_space<vmem>>, %arg2: memref<1112x128xf32, #tpu.memory_space<vmem>>, %arg3: memref<8x128xf32, #tpu.memory_space<vmem>>) attributes {dimension_semantics = [#tpu.dimension_semantics<parallel>], iteration_bounds = array<i64: 1>, scalar_prefetch = 0 : i64, scratch_operands = 0 : i64, tpu.core_type = #tpu.core_type<tc>, window_params = [{transform_indices = @transform_0, window_bounds = array<i64: 1112, 128>}, {transform_indices = @transform_1, window_bounds = array<i64: 1112, 128>}, {transform_indices = @transform_2, window_bounds = array<i64: 8, 128>}]} {
    %c0 = arith.constant 0 : index
    %c0_0 = arith.constant 0 : index
    %0 = vector.load %arg1[%c0, %c0_0] : memref<1112x128xf32, #tpu.memory_space<vmem>>, vector<1112x128xf32>
    %c0_1 = arith.constant 0 : index
    %c0_2 = arith.constant 0 : index
    %1 = vector.load %arg2[%c0_1, %c0_2] : memref<1112x128xf32, #tpu.memory_space<vmem>>, vector<1112x128xf32>
    %2 = arith.cmpf one, %1, %1 : vector<1112x128xf32>
    %cst = arith.constant 0.000000e+00 : f32
    %3 = vector.broadcast %cst : f32 to vector<1112x128xf32>
    %4 = arith.select %2, %3, %1 : vector<1112x128xi1>, vector<1112x128xf32>
    %5 = arith.subf %0, %4 : vector<1112x128xf32>
    %6 = math.absf %5 : vector<1112x128xf32>
    %cst_3 = arith.constant 1.000000e+00 : f32
    %7 = vector.broadcast %cst_3 : f32 to vector<1112x128xf32>
    %8 = arith.cmpf olt, %6, %7 : vector<1112x128xf32>
    %9 = arith.mulf %6, %6 : vector<1112x128xf32>
    %cst_4 = arith.constant 5.000000e-01 : f32
    %10 = vector.broadcast %cst_4 : f32 to vector<1112x128xf32>
    %11 = arith.mulf %9, %10 : vector<1112x128xf32>
    %cst_5 = arith.constant 5.000000e-01 : f32
    %12 = vector.broadcast %cst_5 : f32 to vector<1112x128xf32>
    %13 = arith.subf %6, %12 : vector<1112x128xf32>
    %14 = arith.select %8, %11, %13 : vector<1112x128xi1>, vector<1112x128xf32>
    %c1112_i32 = arith.constant 1112 : i32
    %15 = arith.muli %arg0, %c1112_i32 : i32
    %16 = tpu.iota {dimensions = array<i32: 0>} : vector<1112x128xi32>
    %17 = vector.broadcast %15 : i32 to vector<1112x128xi32>
    %18 = arith.addi %17, %16 : vector<1112x128xi32>
    %c1105_i32 = arith.constant 1105 : i32
    %19 = vector.broadcast %c1105_i32 : i32 to vector<1112x128xi32>
    %20 = arith.cmpi slt, %18, %19 : vector<1112x128xi32>
    %cst_6 = arith.constant 0.000000e+00 : f32
    %21 = vector.broadcast %cst_6 : f32 to vector<1112x128xf32>
    %22 = arith.select %20, %14, %21 : vector<1112x128xi1>, vector<1112x128xf32>
    %23 = vector.shape_cast %22 : vector<1112x128xf32> to vector<139x8x128xf32>
    %cst_7 = arith.constant dense<0.000000e+00> : vector<8x128xf32>
    %24 = vector.multi_reduction <add>, %23, %cst_7 [0] : vector<139x8x128xf32> to vector<8x128xf32>
    %c0_8 = arith.constant 0 : index
    %c0_9 = arith.constant 0 : index
    %25 = vector.load %arg3[%c0_8, %c0_9] : memref<8x128xf32, #tpu.memory_space<vmem>>, vector<8x128xf32>
    tpu.vector_store %arg3[%c0_8, %c0_9], %24 {strides = array<i32>} : memref<8x128xf32, #tpu.memory_space<vmem>>, vector<8x128xf32>,
    return
  }
  func.func @transform_0(%arg0: i32) -> (i32, i32) {
    %c0_i32 = arith.constant 0 : i32
    %c0_i32_0 = arith.constant 0 : i32
    return %arg0, %c0_i32 : i32, i32
  }
  func.func @transform_1(%arg0: i32) -> (i32, i32) {
    %c0_i32 = arith.constant 0 : i32
    %c0_i32_0 = arith.constant 0 : i32
    return %arg0, %c0_i32 : i32, i32
  }
  func.func @transform_2(%arg0: i32) -> (i32, i32) {
    %c0_i32 = arith.constant 0 : i32
    %c0_i32_0 = arith.constant 0 : i32
    return %arg0, %c0_i32 : i32, i32
  }
}

</mosaic_0001>

<llo_original>
// kernel: tpu_custom_call.1
$region0: #{tpu_custom_call.1}
  #allocation0 [shape = 'u32[]', space=smem, size = 0x4, offset = 0x4, fixed_abs, tag = 'smem constant byte address 0x4 - core index']
  #allocation1 [shape = 'u32[72,128]{1,0:T(1,128)}', space=vmem, size = 0x9000, scoped, tag = 'internal scratch']
  %s0 = inlined_call_operand.hbm [shape: f32[1105,128], index: 0, kind: input, shape index: {}]
  %s1 = inlined_call_operand.hbm [shape: f32[1105,128], index: 1, kind: input, shape index: {}]
  %s2 = inlined_call_operand.hbm [shape: f32[8,128], index: 2, kind: output, shape index: {}]
  %s3 = sld [smem:[#allocation0]]
  $region26: #{tpu_custom_call.1} parent=0
    _
  %s5 = ssub.s32 1, %s3
  %s6 = scalar_select 0, %s5, %s3
  $region1: #{tpu_custom_call.1} parent=0
    #allocation2 [shape = 'u8[569344]{0}', space=vmem, size = 0x8b000, scoped, tag = 'input window, operand 0, single buffered']
    #allocation3 [shape = 's32[1]{0}', space=sflag, size = 0x4, scoped, tag = 'scoped memory for tpu_custom_call.1']
    #allocation4 [shape = 's32[1]{0}', space=sflag, size = 0x4, scoped, tag = 'scoped memory for tpu_custom_call.1']
    #allocation5 [shape = 'u8[569344]{0}', space=vmem, size = 0x8b000, scoped, tag = 'input window, operand 1, single buffered']
    #allocation6 [shape = 's32[1]{0}', space=sflag, size = 0x4, scoped, tag = 'scoped memory for tpu_custom_call.1']
    #allocation7 [shape = 'u8[4096]{0}', space=vmem, size = 0x1000, scoped, tag = 'output window, operand 0, single buffered']
    %7 = vsyncpa [#allocation3], 0
    %8 = vsyncpa [#allocation6], 0
    %9 = vsyncpa [#allocation4], 0
    // Predicated region
    $region2: #{tpu_custom_call.1} parent=1 // pred_check
      _
    $region3: #{tpu_custom_call.1} parent=1 // pred_check_branch
      %11 = sbr.rel (0) target = $region5
    $region4: #{tpu_custom_call.1} parent=1 // pred_region
      %13 = vsyncadd [#allocation3], 0
      %s14 = sshll.u32 %s0, 4
      %s15 = int_to_ptr.hbm [resolvable:$true] %s14
      %s16 = sshll.u32 [#allocation2], 4
      %s17 = int_to_ptr.vmem [resolvable:$true] %s16
      %22 = dma.hbm_to_vmem [thread:$0]  %s15, 17792, %s17, [#allocation3], 128, 128, 8
    $region5: #{tpu_custom_call.1} parent=1 // pred_fallthru
      _
    // Predicated region
    $region6: #{tpu_custom_call.1} parent=1 // pred_check
      _
    $region7: #{tpu_custom_call.1} parent=1 // pred_check_branch
      %24 = sbr.rel (0) target = $region9
    $region8: #{tpu_custom_call.1} parent=1 // pred_region
      %26 = vsyncadd [#allocation6], 0
      %s27 = sshll.u32 %s1, 4
      %s28 = int_to_ptr.hbm [resolvable:$true] %s27
      %s29 = sshll.u32 [#allocation5], 4
      %s30 = int_to_ptr.vmem [resolvable:$true] %s29
      %35 = dma.hbm_to_vmem [thread:$0]  %s28, 17792, %s30, [#allocation6], 128, 128, 8
    $region9: #{tpu_custom_call.1} parent=1 // pred_fallthru
      _
    // Predicated region
    $region10: #{tpu_custom_call.1} parent=1 // pred_check
      _
    $region11: #{tpu_custom_call.1} parent=1 // pred_check_branch
      %37 = sbr.rel (0) target = $region13
    $region12: #{tpu_custom_call.1} parent=1 // pred_region
      %39 = dma.done [#allocation3], 17792
    $region13: #{tpu_custom_call.1} parent=1 // pred_fallthru
      _
    // Predicated region
    $region14: #{tpu_custom_call.1} parent=1 // pred_check
      _
    $region15: #{tpu_custom_call.1} parent=1 // pred_check_branch
      %41 = sbr.rel (0) target = $region17
    $region16: #{tpu_custom_call.1} parent=1 // pred_region
      %43 = dma.done [#allocation6], 17792
    $region17: #{tpu_custom_call.1} parent=1 // pred_fallthru
      _
    %v44 = vld [vmem:[#allocation2] sm:$0xff]
    %v45 = vld [vmem:[#allocation2 + $0x8] sm:$0xff]
    %v46 = vld [vmem:[#allocation2 + $0x10] sm:$0xff]
    %v47 = vld [vmem:[#allocation2 + $0x18] sm:$0xff]
    %v48 = vld [vmem:[#allocation2 + $0x20] sm:$0xff]
    %v49 = vld [vmem:[#allocation2 + $0x28] sm:$0xff]
    %v50 = vld [vmem:[#allocation2 + $0x30] sm:$0xff]
    %v51 = vld [vmem:[#allocation2 + $0x38] sm:$0xff]
    %v52 = vld [vmem:[#allocation2 + $0x40] sm:$0xff]
    %v53 = vld [vmem:[#allocation2 + $0x48] sm:$0xff]
    %v54 = vld [vmem:[#allocation2 + $0x50] sm:$0xff]
    %v55 = vld [vmem:[#allocation2 + $0x58] sm:$0xff]
    %v56 = vld [vmem:[#allocation2 + $0x60] sm:$0xff]
    %v57 = vld [vmem:[#allocation2 + $0x68] sm:$0xff]
    %v58 = vld [vmem:[#allocation2 + $0x70] sm:$0xff]
    %v59 = vld [vmem:[#allocation2 + $0x78] sm:$0xff]
    %v60 = vld [vmem:[#allocation2 + $0x80] sm:$0xff]
    %v61 = vld [vmem:[#allocation2 + $0x88] sm:$0xff]
    %v62 = vld [vmem:[#allocation2 + $0x90] sm:$0xff]
    %v63 = vld [vmem:[#allocation2 + $0x98] sm:$0xff]
    %v64 = vld [vmem:[#allocation2 + $0xa0] sm:$0xff]
    %v65 = vld [vmem:[#allocation2 + $0xa8] sm:$0xff]
    %v66 = vld [vmem:[#allocation2 + $0xb0] sm:$0xff]
    %v67 = vld [vmem:[#allocation2 + $0xb8] sm:$0xff]
    %v68 = vld [vmem:[#allocation2 + $0xc0] sm:$0xff]
    %v69 = vld [vmem:[#allocation2 + $0xc8] sm:$0xff]
    %v70 = vld [vmem:[#allocation2 + $0xd0] sm:$0xff]
    %v71 = vld [vmem:[#allocation2 + $0xd8] sm:$0xff]
    %v72 = vld [vmem:[#allocation2 + $0xe0] sm:$0xff]
    %v73 = vld [vmem:[#allocation2 + $0xe8] sm:$0xff]
    %v74 = vld [vmem:[#allocation2 + $0xf0] sm:$0xff]
    %v75 = vld [vmem:[#allocation2 + $0xf8] sm:$0xff]
    %v76 = vld [vmem:[#allocation2 + $0x100] sm:$0xff]
    %v77 = vld [vmem:[#allocation2 + $0x108] sm:$0xff]
    %v78 = vld [vmem:[#allocation2 + $0x110] sm:$0xff]
    %v79 = vld [vmem:[#allocation2 + $0x118] sm:$0xff]
    %v80 = vld [vmem:[#allocation2 + $0x120] sm:$0xff]
    %v81 = vld [vmem:[#allocation2 + $0x128] sm:$0xff]
    %v82 = vld [vmem:[#allocation2 + $0x130] sm:$0xff]
    %v83 = vld [vmem:[#allocation2 + $0x138] sm:$0xff]
    %v84 = vld [vmem:[#allocation2 + $0x140] sm:$0xff]
    %v85 = vld [vmem:[#allocation2 + $0x148] sm:$0xff]
    %v86 = vld [vmem:[#allocation2 + $0x150] sm:$0xff]
    %v87 = vld [vmem:[#allocation2 + $0x158] sm:$0xff]
    %v88 = vld [vmem:[#allocation2 + $0x160] sm:$0xff]
    %v89 = vld [vmem:[#allocation2 + $0x168] sm:$0xff]
    %v90 = vld [vmem:[#allocation2 + $0x170] sm:$0xff]
    %v91 = vld [vmem:[#allocation2 + $0x178] sm:$0xff]
    %v92 = vld [vmem:[#allocation2 + $0x180] sm:$0xff]
    %v93 = vld [vmem:[#allocation2 + $0x188] sm:$0xff]
    %v94 = vld [vmem:[#allocation2 + $0x190] sm:$0xff]
    %v95 = vld [vmem:[#allocation2 + $0x198] sm:$0xff]
    %v96 = vld [vmem:[#allocation2 + $0x1a0] sm:$0xff]
    %v97 = vld [vmem:[#allocation2 + $0x1a8] sm:$0xff]
    %v98 = vld [vmem:[#allocation2 + $0x1b0] sm:$0xff]
    %v99 = vld [vmem:[#allocation2 + $0x1b8] sm:$0xff]
    %v100 = vld [vmem:[#allocation2 + $0x1c0] sm:$0xff]
    %v101 = vld [vmem:[#allocation2 + $0x1c8] sm:$0xff]
    %v102 = vld [vmem:[#allocation2 + $0x1d0] sm:$0xff]
    %v103 = vld [vmem:[#allocation2 + $0x1d8] sm:$0xff]
    %v104 = vld [vmem:[#allocation2 + $0x1e0] sm:$0xff]
    %v105 = vld [vmem:[#allocation2 + $0x1e8] sm:$0xff]
    %v106 = vld [vmem:[#allocation2 + $0x1f0] sm:$0xff]
    %v107 = vld [vmem:[#allocation2 + $0x1f8] sm:$0xff]
    %v108 = vld [vmem:[#allocation2 + $0x200] sm:$0xff]
    %v109 = vld [vmem:[#allocation2 + $0x208] sm:$0xff]
    %v110 = vld [vmem:[#allocation2 + $0x210] sm:$0xff]
    %v111 = vld [vmem:[#allocation2 + $0x218] sm:$0xff]
    %v112 = vld [vmem:[#allocation2 + $0x220] sm:$0xff]
    %v113 = vld [vmem:[#allocation2 + $0x228] sm:$0xff]
    %v114 = vld [vmem:[#allocation2 + $0x230] sm:$0xff]
    %v115 = vld [vmem:[#allocation2 + $0x238] sm:$0xff]
    %v116 = vld [vmem:[#allocation2 + $0x240] sm:$0xff]
    %v117 = vld [vmem:[#allocation2 + $0x248] sm:$0xff]
    %v118 = vld [vmem:[#allocation2 + $0x250] sm:$0xff]
    %v119 = vld [vmem:[#allocation2 + $0x258] sm:$0xff]
    %v120 = vld [vmem:[#allocation2 + $0x260] sm:$0xff]
    %v121 = vld [vmem:[#allocation2 + $0x268] sm:$0xff]
    %v122 = vld [vmem:[#allocation2 + $0x270] sm:$0xff]
    %v123 = vld [vmem:[#allocation2 + $0x278] sm:$0xff]
    %v124 = vld [vmem:[#allocation2 + $0x280] sm:$0xff]
    %v125 = vld [vmem:[#allocation2 + $0x288] sm:$0xff]
    %v126 = vld [vmem:[#allocation2 + $0x290] sm:$0xff]
    %v127 = vld [vmem:[#allocation2 + $0x298] sm:$0xff]
    %v128 = vld [vmem:[#allocation2 + $0x2a0] sm:$0xff]
    %v129 = vld [vmem:[#allocation2 + $0x2a8] sm:$0xff]
    %v130 = vld [vmem:[#allocation2 + $0x2b0] sm:$0xff]
    %v131 = vld [vmem:[#allocation2 + $0x2b8] sm:$0xff]
    %v132 = vld [vmem:[#allocation2 + $0x2c0] sm:$0xff]
    %v133 = vld [vmem:[#allocation2 + $0x2c8] sm:$0xff]
    %v134 = vld [vmem:[#allocation2 + $0x2d0] sm:$0xff]
    %v135 = vld [vmem:[#allocation2 + $0x2d8] sm:$0xff]
    %v136 = vld [vmem:[#allocation2 + $0x2e0] sm:$0xff]
    %v137 = vld [vmem:[#allocation2 + $0x2e8] sm:$0xff]
    %v138 = vld [vmem:[#allocation2 + $0x2f0] sm:$0xff]
    %v139 = vld [vmem:[#allocation2 + $0x2f8] sm:$0xff]
    %v140 = vld [vmem:[#allocation2 + $0x300] sm:$0xff]
    %v141 = vld [vmem:[#allocation2 + $0x308] sm:$0xff]
    %v142 = vld [vmem:[#allocation2 + $0x310] sm:$0xff]
    %v143 = vld [vmem:[#allocation2 + $0x318] sm:$0xff]
    %v144 = vld [vmem:[#allocation2 + $0x320] sm:$0xff]
    %v145 = vld [vmem:[#allocation2 + $0x328] sm:$0xff]
    %v146 = vld [vmem:[#allocation2 + $0x330] sm:$0xff]
    %v147 = vld [vmem:[#allocation2 + $0x338] sm:$0xff]
    %v148 = vld [vmem:[#allocation2 + $0x340] sm:$0xff]
    %v149 = vld [vmem:[#allocation2 + $0x348] sm:$0xff]
    %v150 = vld [vmem:[#allocation2 + $0x350] sm:$0xff]
    %v151 = vld [vmem:[#allocation2 + $0x358] sm:$0xff]
    %v152 = vld [vmem:[#allocation2 + $0x360] sm:$0xff]
    %v153 = vld [vmem:[#allocation2 + $0x368] sm:$0xff]
    %v154 = vld [vmem:[#allocation2 + $0x370] sm:$0xff]
    %v155 = vld [vmem:[#allocation2 + $0x378] sm:$0xff]
    %v156 = vld [vmem:[#allocation2 + $0x380] sm:$0xff]
    %v157 = vld [vmem:[#allocation2 + $0x388] sm:$0xff]
    %v158 = vld [vmem:[#allocation2 + $0x390] sm:$0xff]
    %v159 = vld [vmem:[#allocation2 + $0x398] sm:$0xff]
    %v160 = vld [vmem:[#allocation2 + $0x3a0] sm:$0xff]
    %v161 = vld [vmem:[#allocation2 + $0x3a8] sm:$0xff]
    %v162 = vld [vmem:[#allocation2 + $0x3b0] sm:$0xff]
    %v163 = vld [vmem:[#allocation2 + $0x3b8] sm:$0xff]
    %v164 = vld [vmem:[#allocation2 + $0x3c0] sm:$0xff]
    %v165 = vld [vmem:[#allocation2 + $0x3c8] sm:$0xff]
    %v166 = vld [vmem:[#allocation2 + $0x3d0] sm:$0xff]
    %v167 = vld [vmem:[#allocation2 + $0x3d8] sm:$0xff]
    %v168 = vld [vmem:[#allocation2 + $0x3e0] sm:$0xff]
    %v169 = vld [vmem:[#allocation2 + $0x3e8] sm:$0xff]
    %v170 = vld [vmem:[#allocation2 + $0x3f0] sm:$0xff]
    %v171 = vld [vmem:[#allocation2 + $0x3f8] sm:$0xff]
    %v172 = vld [vmem:[#allocation2 + $0x400] sm:$0xff]
    %v173 = vld [vmem:[#allocation2 + $0x408] sm:$0xff]
    %v174 = vld [vmem:[#allocation2 + $0x410] sm:$0xff]
    %v175 = vld [vmem:[#allocation2 + $0x418] sm:$0xff]
    %v176 = vld [vmem:[#allocation2 + $0x420] sm:$0xff]
    %v177 = vld [vmem:[#allocation2 + $0x428] sm:$0xff]
    %v178 = vld [vmem:[#allocation2 + $0x430] sm:$0xff]
    %v179 = vld [vmem:[#allocation2 + $0x438] sm:$0xff]
    %v180 = vld [vmem:[#allocation2 + $0x440] sm:$0xff]
    %v181 = vld [vmem:[#allocation2 + $0x448] sm:$0xff]
    %v182 = vld [vmem:[#allocation2 + $0x450] sm:$0xff]
    %v183 = vld [vmem:[#allocation5] sm:$0xff]
    %v184 = vld [vmem:[#allocation5 + $0x8] sm:$0xff]
    %v185 = vld [vmem:[#allocation5 + $0x10] sm:$0xff]
    %v186 = vld [vmem:[#allocation5 + $0x18] sm:$0xff]
    %v187 = vld [vmem:[#allocation5 + $0x20] sm:$0xff]
    %v188 = vld [vmem:[#allocation5 + $0x28] sm:$0xff]
    %v189 = vld [vmem:[#allocation5 + $0x30] sm:$0xff]
    %v190 = vld [vmem:[#allocation5 + $0x38] sm:$0xff]
    %v191 = vld [vmem:[#allocation5 + $0x40] sm:$0xff]
    %v192 = vld [vmem:[#allocation5 + $0x48] sm:$0xff]
    %v193 = vld [vmem:[#allocation5 + $0x50] sm:$0xff]
    %v194 = vld [vmem:[#allocation5 + $0x58] sm:$0xff]
    %v195 = vld [vmem:[#allocation5 + $0x60] sm:$0xff]
    %v196 = vld [vmem:[#allocation5 + $0x68] sm:$0xff]
    %v197 = vld [vmem:[#allocation5 + $0x70] sm:$0xff]
    %v198 = vld [vmem:[#allocation5 + $0x78] sm:$0xff]
    %v199 = vld [vmem:[#allocation5 + $0x80] sm:$0xff]
    %v200 = vld [vmem:[#allocation5 + $0x88] sm:$0xff]
    %v201 = vld [vmem:[#allocation5 + $0x90] sm:$0xff]
    %v202 = vld [vmem:[#allocation5 + $0x98] sm:$0xff]
    %v203 = vld [vmem:[#allocation5 + $0xa0] sm:$0xff]
    %v204 = vld [vmem:[#allocation5 + $0xa8] sm:$0xff]
    %v205 = vld [vmem:[#allocation5 + $0xb0] sm:$0xff]
    %v206 = vld [vmem:[#allocation5 + $0xb8] sm:$0xff]
    %v207 = vld [vmem:[#allocation5 + $0xc0] sm:$0xff]
    %v208 = vld [vmem:[#allocation5 + $0xc8] sm:$0xff]
    %v209 = vld [vmem:[#allocation5 + $0xd0] sm:$0xff]
    %v210 = vld [vmem:[#allocation5 + $0xd8] sm:$0xff]
    %v211 = vld [vmem:[#allocation5 + $0xe0] sm:$0xff]
    %v212 = vld [vmem:[#allocation5 + $0xe8] sm:$0xff]
    %v213 = vld [vmem:[#allocation5 + $0xf0] sm:$0xff]
    %v214 = vld [vmem:[#allocation5 + $0xf8] sm:$0xff]
    %v215 = vld [vmem:[#allocation5 + $0x100] sm:$0xff]
    %v216 = vld [vmem:[#allocation5 + $0x108] sm:$0xff]
    %v217 = vld [vmem:[#allocation5 + $0x110] sm:$0xff]
    %v218 = vld [vmem:[#allocation5 + $0x118] sm:$0xff]
    %v219 = vld [vmem:[#allocation5 + $0x120] sm:$0xff]
    %v220 = vld [vmem:[#allocation5 + $0x128] sm:$0xff]
    %v221 = vld [vmem:[#allocation5 + $0x130] sm:$0xff]
    %v222 = vld [vmem:[#allocation5 + $0x138] sm:$0xff]
    %v223 = vld [vmem:[#allocation5 + $0x140] sm:$0xff]
    %v224 = vld [vmem:[#allocation5 + $0x148] sm:$0xff]
    %v225 = vld [vmem:[#allocation5 + $0x150] sm:$0xff]
    %v226 = vld [vmem:[#allocation5 + $0x158] sm:$0xff]
    %v227 = vld [vmem:[#allocation5 + $0x160] sm:$0xff]
    %v228 = vld [vmem:[#allocation5 + $0x168] sm:$0xff]
    %v229 = vld [vmem:[#allocation5 + $0x170] sm:$0xff]
    %v230 = vld [vmem:[#allocation5 + $0x178] sm:$0xff]
    %v231 = vld [vmem:[#allocation5 + $0x180] sm:$0xff]
    %v232 = vld [vmem:[#allocation5 + $0x188] sm:$0xff]
    %v233 = vld [vmem:[#allocation5 + $0x190] sm:$0xff]
    %v234 = vld [vmem:[#allocation5 + $0x198] sm:$0xff]
    %v235 = vld [vmem:[#allocation5 + $0x1a0] sm:$0xff]
    %v236 = vld [vmem:[#allocation5 + $0x1a8] sm:$0xff]
    %v237 = vld [vmem:[#allocation5 + $0x1b0] sm:$0xff]
    %v238 = vld [vmem:[#allocation5 + $0x1b8] sm:$0xff]
    %v239 = vld [vmem:[#allocation5 + $0x1c0] sm:$0xff]
    %v240 = vld [vmem:[#allocation5 + $0x1c8] sm:$0xff]
    %v241 = vld [vmem:[#allocation5 + $0x1d0] sm:$0xff]
    %v242 = vld [vmem:[#allocation5 + $0x1d8] sm:$0xff]
    %v243 = vld [vmem:[#allocation5 + $0x1e0] sm:$0xff]
    %v244 = vld [vmem:[#allocation5 + $0x1e8] sm:$0xff]
    %v245 = vld [vmem:[#allocation5 + $0x1f0] sm:$0xff]
    %v246 = vld [vmem:[#allocation5 + $0x1f8] sm:$0xff]
    %v247 = vld [vmem:[#allocation5 + $0x200] sm:$0xff]
    %v248 = vld [vmem:[#allocation5 + $0x208] sm:$0xff]
    %v249 = vld [vmem:[#allocation5 + $0x210] sm:$0xff]
    %v250 = vld [vmem:[#allocation5 + $0x218] sm:$0xff]
    %v251 = vld [vmem:[#allocation5 + $0x220] sm:$0xff]
    %v252 = vld [vmem:[#allocation5 + $0x228] sm:$0xff]
    %v253 = vld [vmem:[#allocation5 + $0x230] sm:$0xff]
    %v254 = vld [vmem:[#allocation5 + $0x238] sm:$0xff]
    %v255 = vld [vmem:[#allocation5 + $0x240] sm:$0xff]
    %v256 = vld [vmem:[#allocation5 + $0x248] sm:$0xff]
    %v257 = vld [vmem:[#allocation5 + $0x250] sm:$0xff]
    %v258 = vld [vmem:[#allocation5 + $0x258] sm:$0xff]
    %v259 = vld [vmem:[#allocation5 + $0x260] sm:$0xff]
    %v260 = vld [vmem:[#allocation5 + $0x268] sm:$0xff]
    %v261 = vld [vmem:[#allocation5 + $0x270] sm:$0xff]
    %v262 = vld [vmem:[#allocation5 + $0x278] sm:$0xff]
    %v263 = vld [vmem:[#allocation5 + $0x280] sm:$0xff]
    %v264 = vld [vmem:[#allocation5 + $0x288] sm:$0xff]
    %v265 = vld [vmem:[#allocation5 + $0x290] sm:$0xff]
    %v266 = vld [vmem:[#allocation5 + $0x298] sm:$0xff]
    %v267 = vld [vmem:[#allocation5 + $0x2a0] sm:$0xff]
    %v268 = vld [vmem:[#allocation5 + $0x2a8] sm:$0xff]
    %v269 = vld [vmem:[#allocation5 + $0x2b0] sm:$0xff]
    %v270 = vld [vmem:[#allocation5 + $0x2b8] sm:$0xff]
    %v271 = vld [vmem:[#allocation5 + $0x2c0] sm:$0xff]
    %v272 = vld [vmem:[#allocation5 + $0x2c8] sm:$0xff]
    %v273 = vld [vmem:[#allocation5 + $0x2d0] sm:$0xff]
    %v274 = vld [vmem:[#allocation5 + $0x2d8] sm:$0xff]
    %v275 = vld [vmem:[#allocation5 + $0x2e0] sm:$0xff]
    %v276 = vld [vmem:[#allocation5 + $0x2e8] sm:$0xff]
    %v277 = vld [vmem:[#allocation5 + $0x2f0] sm:$0xff]
    %v278 = vld [vmem:[#allocation5 + $0x2f8] sm:$0xff]
    %v279 = vld [vmem:[#allocation5 + $0x300] sm:$0xff]
    %v280 = vld [vmem:[#allocation5 + $0x308] sm:$0xff]
    %v281 = vld [vmem:[#allocation5 + $0x310] sm:$0xff]
    %v282 = vld [vmem:[#allocation5 + $0x318] sm:$0xff]
    %v283 = vld [vmem:[#allocation5 + $0x320] sm:$0xff]
    %v284 = vld [vmem:[#allocation5 + $0x328] sm:$0xff]
    %v285 = vld [vmem:[#allocation5 + $0x330] sm:$0xff]
    %v286 = vld [vmem:[#allocation5 + $0x338] sm:$0xff]
    %v287 = vld [vmem:[#allocation5 + $0x340] sm:$0xff]
    %v288 = vld [vmem:[#allocation5 + $0x348] sm:$0xff]
    %v289 = vld [vmem:[#allocation5 + $0x350] sm:$0xff]
    %v290 = vld [vmem:[#allocation5 + $0x358] sm:$0xff]
    %v291 = vld [vmem:[#allocation5 + $0x360] sm:$0xff]
    %v292 = vld [vmem:[#allocation5 + $0x368] sm:$0xff]
    %v293 = vld [vmem:[#allocation5 + $0x370] sm:$0xff]
    %v294 = vld [vmem:[#allocation5 + $0x378] sm:$0xff]
    %v295 = vld [vmem:[#allocation5 + $0x380] sm:$0xff]
    %v296 = vld [vmem:[#allocation5 + $0x388] sm:$0xff]
    %v297 = vld [vmem:[#allocation5 + $0x390] sm:$0xff]
    %v298 = vld [vmem:[#allocation5 + $0x398] sm:$0xff]
    %v299 = vld [vmem:[#allocation5 + $0x3a0] sm:$0xff]
    %v300 = vld [vmem:[#allocation5 + $0x3a8] sm:$0xff]
    %v301 = vld [vmem:[#allocation5 + $0x3b0] sm:$0xff]
    %v302 = vld [vmem:[#allocation5 + $0x3b8] sm:$0xff]
    %v303 = vld [vmem:[#allocation5 + $0x3c0] sm:$0xff]
    %v304 = vld [vmem:[#allocation5 + $0x3c8] sm:$0xff]
    %v305 = vld [vmem:[#allocation5 + $0x3d0] sm:$0xff]
    %v306 = vld [vmem:[#allocation5 + $0x3d8] sm:$0xff]
    %v307 = vld [vmem:[#allocation5 + $0x3e0] sm:$0xff]
    %v308 = vld [vmem:[#allocation5 + $0x3e8] sm:$0xff]
    %v309 = vld [vmem:[#allocation5 + $0x3f0] sm:$0xff]
    %v310 = vld [vmem:[#allocation5 + $0x3f8] sm:$0xff]
    %v311 = vld [vmem:[#allocation5 + $0x400] sm:$0xff]
    %v312 = vld [vmem:[#allocation5 + $0x408] sm:$0xff]
    %v313 = vld [vmem:[#allocation5 + $0x410] sm:$0xff]
    %v314 = vld [vmem:[#allocation5 + $0x418] sm:$0xff]
    %v315 = vld [vmem:[#allocation5 + $0x420] sm:$0xff]
    %v316 = vld [vmem:[#allocation5 + $0x428] sm:$0xff]
    %v317 = vld [vmem:[#allocation5 + $0x430] sm:$0xff]
    %v318 = vld [vmem:[#allocation5 + $0x438] sm:$0xff]
    %v319 = vld [vmem:[#allocation5 + $0x440] sm:$0xff]
    %v320 = vld [vmem:[#allocation5 + $0x448] sm:$0xff]
    %v321 = vld [vmem:[#allocation5 + $0x450] sm:$0xff]
    %vm322 = vcmp.ne.f32.partialorder %v183, %v183
    %vm323 = vcmp.ne.f32.partialorder %v184, %v184
    %vm324 = vcmp.ne.f32.partialorder %v185, %v185
    %vm325 = vcmp.ne.f32.partialorder %v186, %v186
    %vm326 = vcmp.ne.f32.partialorder %v187, %v187
    %vm327 = vcmp.ne.f32.partialorder %v188, %v188
    %vm328 = vcmp.ne.f32.partialorder %v189, %v189
    %vm329 = vcmp.ne.f32.partialorder %v190, %v190
    %vm330 = vcmp.ne.f32.partialorder %v191, %v191
    %vm331 = vcmp.ne.f32.partialorder %v192, %v192
    %vm332 = vcmp.ne.f32.partialorder %v193, %v193
    %vm333 = vcmp.ne.f32.partialorder %v194, %v194
    %vm334 = vcmp.ne.f32.partialorder %v195, %v195
    %vm335 = vcmp.ne.f32.partialorder %v196, %v196
    %vm336 = vcmp.ne.f32.partialorder %v197, %v197
    %vm337 = vcmp.ne.f32.partialorder %v198, %v198
    %vm338 = vcmp.ne.f32.partialorder %v199, %v199
    %vm339 = vcmp.ne.f32.partialorder %v200, %v200
    %vm340 = vcmp.ne.f32.partialorder %v201, %v201
    %vm341 = vcmp.ne.f32.partialorder %v202, %v202
    %vm342 = vcmp.ne.f32.partialorder %v203, %v203
    %vm343 = vcmp.ne.f32.partialorder %v204, %v204
    %vm344 = vcmp.ne.f32.partialorder %v205, %v205
    %vm345 = vcmp.ne.f32.partialorder %v206, %v206
    %vm346 = vcmp.ne.f32.partialorder %v207, %v207
    %vm347 = vcmp.ne.f32.partialorder %v208, %v208
    %vm348 = vcmp.ne.f32.partialorder %v209, %v209
    %vm349 = vcmp.ne.f32.partialorder %v210, %v210
    %vm350 = vcmp.ne.f32.partialorder %v211, %v211
    %vm351 = vcmp.ne.f32.partialorder %v212, %v212
    %vm352 = vcmp.ne.f32.partialorder %v213, %v213
    %vm353 = vcmp.ne.f32.partialorder %v214, %v214
    %vm354 = vcmp.ne.f32.partialorder %v215, %v215
    %vm355 = vcmp.ne.f32.partialorder %v216, %v216
    %vm356 = vcmp.ne.f32.partialorder %v217, %v217
    %vm357 = vcmp.ne.f32.partialorder %v218, %v218
    %vm358 = vcmp.ne.f32.partialorder %v219, %v219
    %vm359 = vcmp.ne.f32.partialorder %v220, %v220
    %vm360 = vcmp.ne.f32.partialorder %v221, %v221
    %vm361 = vcmp.ne.f32.partialorder %v222, %v222
    %vm362 = vcmp.ne.f32.partialorder %v223, %v223
    %vm363 = vcmp.ne.f32.partialorder %v224, %v224
    %vm364 = vcmp.ne.f32.partialorder %v225, %v225
    %vm365 = vcmp.ne.f32.partialorder %v226, %v226
    %vm366 = vcmp.ne.f32.partialorder %v227, %v227
    %vm367 = vcmp.ne.f32.partialorder %v228, %v228
    %vm368 = vcmp.ne.f32.partialorder %v229, %v229
    %vm369 = vcmp.ne.f32.partialorder %v230, %v230
    %vm370 = vcmp.ne.f32.partialorder %v231, %v231
    %vm371 = vcmp.ne.f32.partialorder %v232, %v232
    %vm372 = vcmp.ne.f32.partialorder %v233, %v233
    %vm373 = vcmp.ne.f32.partialorder %v234, %v234
    %vm374 = vcmp.ne.f32.partialorder %v235, %v235
    %vm375 = vcmp.ne.f32.partialorder %v236, %v236
    %vm376 = vcmp.ne.f32.partialorder %v237, %v237
    %vm377 = vcmp.ne.f32.partialorder %v238, %v238
    %vm378 = vcmp.ne.f32.partialorder %v239, %v239
    %vm379 = vcmp.ne.f32.partialorder %v240, %v240
    %vm380 = vcmp.ne.f32.partialorder %v241, %v241
    %vm381 = vcmp.ne.f32.partialorder %v242, %v242
    %vm382 = vcmp.ne.f32.partialorder %v243, %v243
    %vm383 = vcmp.ne.f32.partialorder %v244, %v244
    %vm384 = vcmp.ne.f32.partialorder %v245, %v245
    %vm385 = vcmp.ne.f32.partialorder %v246, %v246
    %vm386 = vcmp.ne.f32.partialorder %v247, %v247
    %vm387 = vcmp.ne.f32.partialorder %v248, %v248
    %vm388 = vcmp.ne.f32.partialorder %v249, %v249
    %vm389 = vcmp.ne.f32.partialorder %v250, %v250
    %vm390 = vcmp.ne.f32.partialorder %v251, %v251
    %vm391 = vcmp.ne.f32.partialorder %v252, %v252
    %vm392 = vcmp.ne.f32.partialorder %v253, %v253
    %vm393 = vcmp.ne.f32.partialorder %v254, %v254
    %vm394 = vcmp.ne.f32.partialorder %v255, %v255
    %vm395 = vcmp.ne.f32.partialorder %v256, %v256
    %vm396 = vcmp.ne.f32.partialorder %v257, %v257
    %vm397 = vcmp.ne.f32.partialorder %v258, %v258
    %vm398 = vcmp.ne.f32.partialorder %v259, %v259
    %vm399 = vcmp.ne.f32.partialorder %v260, %v260
    %vm400 = vcmp.ne.f32.partialorder %v261, %v261
    %vm401 = vcmp.ne.f32.partialorder %v262, %v262
    %vm402 = vcmp.ne.f32.partialorder %v263, %v263
    %vm403 = vcmp.ne.f32.partialorder %v264, %v264
    %vm404 = vcmp.ne.f32.partialorder %v265, %v265
    %vm405 = vcmp.ne.f32.partialorder %v266, %v266
    %vm406 = vcmp.ne.f32.partialorder %v267, %v267
    %vm407 = vcmp.ne.f32.partialorder %v268, %v268
    %vm408 = vcmp.ne.f32.partialorder %v269, %v269
    %vm409 = vcmp.ne.f32.partialorder %v270, %v270
    %vm410 = vcmp.ne.f32.partialorder %v271, %v271
    %vm411 = vcmp.ne.f32.partialorder %v272, %v272
    %vm412 = vcmp.ne.f32.partialorder %v273, %v273
    %vm413 = vcmp.ne.f32.partialorder %v274, %v274
    %vm414 = vcmp.ne.f32.partialorder %v275, %v275
    %vm415 = vcmp.ne.f32.partialorder %v276, %v276
    %vm416 = vcmp.ne.f32.partialorder %v277, %v277
    %vm417 = vcmp.ne.f32.partialorder %v278, %v278
    %vm418 = vcmp.ne.f32.partialorder %v279, %v279
    %vm419 = vcmp.ne.f32.partialorder %v280, %v280
    %vm420 = vcmp.ne.f32.partialorder %v281, %v281
    %vm421 = vcmp.ne.f32.partialorder %v282, %v282
    %vm422 = vcmp.ne.f32.partialorder %v283, %v283
    %vm423 = vcmp.ne.f32.partialorder %v284, %v284
    %vm424 = vcmp.ne.f32.partialorder %v285, %v285
    %vm425 = vcmp.ne.f32.partialorder %v286, %v286
    %vm426 = vcmp.ne.f32.partialorder %v287, %v287
    %vm427 = vcmp.ne.f32.partialorder %v288, %v288
    %vm428 = vcmp.ne.f32.partialorder %v289, %v289
    %vm429 = vcmp.ne.f32.partialorder %v290, %v290
    %vm430 = vcmp.ne.f32.partialorder %v291, %v291
    %vm431 = vcmp.ne.f32.partialorder %v292, %v292
    %vm432 = vcmp.ne.f32.partialorder %v293, %v293
    %vm433 = vcmp.ne.f32.partialorder %v294, %v294
    %vm434 = vcmp.ne.f32.partialorder %v295, %v295
    %vm435 = vcmp.ne.f32.partialorder %v296, %v296
    %vm436 = vcmp.ne.f32.partialorder %v297, %v297
    %vm437 = vcmp.ne.f32.partialorder %v298, %v298
    %vm438 = vcmp.ne.f32.partialorder %v299, %v299
    %vm439 = vcmp.ne.f32.partialorder %v300, %v300
    %vm440 = vcmp.ne.f32.partialorder %v301, %v301
    %vm441 = vcmp.ne.f32.partialorder %v302, %v302
    %vm442 = vcmp.ne.f32.partialorder %v303, %v303
    %vm443 = vcmp.ne.f32.partialorder %v304, %v304
    %vm444 = vcmp.ne.f32.partialorder %v305, %v305
    %vm445 = vcmp.ne.f32.partialorder %v306, %v306
    %vm446 = vcmp.ne.f32.partialorder %v307, %v307
    %vm447 = vcmp.ne.f32.partialorder %v308, %v308
    %vm448 = vcmp.ne.f32.partialorder %v309, %v309
    %vm449 = vcmp.ne.f32.partialorder %v310, %v310
    %vm450 = vcmp.ne.f32.partialorder %v311, %v311
    %vm451 = vcmp.ne.f32.partialorder %v312, %v312
    %vm452 = vcmp.ne.f32.partialorder %v313, %v313
    %vm453 = vcmp.ne.f32.partialorder %v314, %v314
    %vm454 = vcmp.ne.f32.partialorder %v315, %v315
    %vm455 = vcmp.ne.f32.partialorder %v316, %v316
    %vm456 = vcmp.ne.f32.partialorder %v317, %v317
    %vm457 = vcmp.ne.f32.partialorder %v318, %v318
    %vm458 = vcmp.ne.f32.partialorder %v319, %v319
    %vm459 = vcmp.ne.f32.partialorder %v320, %v320
    %vm460 = vcmp.ne.f32.partialorder %v321, %v321
    %v461 = vsel %vm322, 0.0, %v183
    %v462 = vsel %vm323, 0.0, %v184
    %v463 = vsel %vm324, 0.0, %v185
    %v464 = vsel %vm325, 0.0, %v186
    %v465 = vsel %vm326, 0.0, %v187
    %v466 = vsel %vm327, 0.0, %v188
    %v467 = vsel %vm328, 0.0, %v189
    %v468 = vsel %vm329, 0.0, %v190
    %v469 = vsel %vm330, 0.0, %v191
    %v470 = vsel %vm331, 0.0, %v192
    %v471 = vsel %vm332, 0.0, %v193
    %v472 = vsel %vm333, 0.0, %v194
    %v473 = vsel %vm334, 0.0, %v195
    %v474 = vsel %vm335, 0.0, %v196
    %v475 = vsel %vm336, 0.0, %v197
    %v476 = vsel %vm337, 0.0, %v198
    %v477 = vsel %vm338, 0.0, %v199
    %v478 = vsel %vm339, 0.0, %v200
    %v479 = vsel %vm340, 0.0, %v201
    %v480 = vsel %vm341, 0.0, %v202
    %v481 = vsel %vm342, 0.0, %v203
    %v482 = vsel %vm343, 0.0, %v204
    %v483 = vsel %vm344, 0.0, %v205
    %v484 = vsel %vm345, 0.0, %v206
    %v485 = vsel %vm346, 0.0, %v207
    %v486 = vsel %vm347, 0.0, %v208
    %v487 = vsel %vm348, 0.0, %v209
    %v488 = vsel %vm349, 0.0, %v210
    %v489 = vsel %vm350, 0.0, %v211
    %v490 = vsel %vm351, 0.0, %v212
    %v491 = vsel %vm352, 0.0, %v213
    %v492 = vsel %vm353, 0.0, %v214
    %v493 = vsel %vm354, 0.0, %v215
    %v494 = vsel %vm355, 0.0, %v216
    %v495 = vsel %vm356, 0.0, %v217
    %v496 = vsel %vm357, 0.0, %v218
    %v497 = vsel %vm358, 0.0, %v219
    %v498 = vsel %vm359, 0.0, %v220
    %v499 = vsel %vm360, 0.0, %v221
    %v500 = vsel %vm361, 0.0, %v222
    %v501 = vsel %vm362, 0.0, %v223
    %v502 = vsel %vm363, 0.0, %v224
    %v503 = vsel %vm364, 0.0, %v225
    %v504 = vsel %vm365, 0.0, %v226
    %v505 = vsel %vm366, 0.0, %v227
    %v506 = vsel %vm367, 0.0, %v228
    %v507 = vsel %vm368, 0.0, %v229
    %v508 = vsel %vm369, 0.0, %v230
    %v509 = vsel %vm370, 0.0, %v231
    %v510 = vsel %vm371, 0.0, %v232
    %v511 = vsel %vm372, 0.0, %v233
    %v512 = vsel %vm373, 0.0, %v234
    %v513 = vsel %vm374, 0.0, %v235
    %v514 = vsel %vm375, 0.0, %v236
    %v515 = vsel %vm376, 0.0, %v237
    %v516 = vsel %vm377, 0.0, %v238
    %v517 = vsel %vm378, 0.0, %v239
    %v518 = vsel %vm379, 0.0, %v240
    %v519 = vsel %vm380, 0.0, %v241
    %v520 = vsel %vm381, 0.0, %v242
    %v521 = vsel %vm382, 0.0, %v243
    %v522 = vsel %vm383, 0.0, %v244
    %v523 = vsel %vm384, 0.0, %v245
    %v524 = vsel %vm385, 0.0, %v246
    %v525 = vsel %vm386, 0.0, %v247
    %v526 = vsel %vm387, 0.0, %v248
    %v527 = vsel %vm388, 0.0, %v249
    %v528 = vsel %vm389, 0.0, %v250
    %v529 = vsel %vm390, 0.0, %v251
    %v530 = vsel %vm391, 0.0, %v252
    %v531 = vsel %vm392, 0.0, %v253
    %v532 = vsel %vm393, 0.0, %v254
    %v533 = vsel %vm394, 0.0, %v255
    %v534 = vsel %vm395, 0.0, %v256
    %v535 = vsel %vm396, 0.0, %v257
    %v536 = vsel %vm397, 0.0, %v258
    %v537 = vsel %vm398, 0.0, %v259
    %v538 = vsel %vm399, 0.0, %v260
    %v539 = vsel %vm400, 0.0, %v261
    %v540 = vsel %vm401, 0.0, %v262
    %v541 = vsel %vm402, 0.0, %v263
    %v542 = vsel %vm403, 0.0, %v264
    %v543 = vsel %vm404, 0.0, %v265
    %v544 = vsel %vm405, 0.0, %v266
    %v545 = vsel %vm406, 0.0, %v267
    %v546 = vsel %vm407, 0.0, %v268
    %v547 = vsel %vm408, 0.0, %v269
    %v548 = vsel %vm409, 0.0, %v270
    %v549 = vsel %vm410, 0.0, %v271
    %v550 = vsel %vm411, 0.0, %v272
    %v551 = vsel %vm412, 0.0, %v273
    %v552 = vsel %vm413, 0.0, %v274
    %v553 = vsel %vm414, 0.0, %v275
    %v554 = vsel %vm415, 0.0, %v276
    %v555 = vsel %vm416, 0.0, %v277
    %v556 = vsel %vm417, 0.0, %v278
    %v557 = vsel %vm418, 0.0, %v279
    %v558 = vsel %vm419, 0.0, %v280
    %v559 = vsel %vm420, 0.0, %v281
    %v560 = vsel %vm421, 0.0, %v282
    %v561 = vsel %vm422, 0.0, %v283
    %v562 = vsel %vm423, 0.0, %v284
    %v563 = vsel %vm424, 0.0, %v285
    %v564 = vsel %vm425, 0.0, %v286
    %v565 = vsel %vm426, 0.0, %v287
    %v566 = vsel %vm427, 0.0, %v288
    %v567 = vsel %vm428, 0.0, %v289
    %v568 = vsel %vm429, 0.0, %v290
    %v569 = vsel %vm430, 0.0, %v291
    %v570 = vsel %vm431, 0.0, %v292
    %v571 = vsel %vm432, 0.0, %v293
    %v572 = vsel %vm433, 0.0, %v294
    %v573 = vsel %vm434, 0.0, %v295
    %v574 = vsel %vm435, 0.0, %v296
    %v575 = vsel %vm436, 0.0, %v297
    %v576 = vsel %vm437, 0.0, %v298
    %v577 = vsel %vm438, 0.0, %v299
    %v578 = vsel %vm439, 0.0, %v300
    %v579 = vsel %vm440, 0.0, %v301
    %v580 = vsel %vm441, 0.0, %v302
    %v581 = vsel %vm442, 0.0, %v303
    %v582 = vsel %vm443, 0.0, %v304
    %v583 = vsel %vm444, 0.0, %v305
    %v584 = vsel %vm445, 0.0, %v306
    %v585 = vsel %vm446, 0.0, %v307
    %v586 = vsel %vm447, 0.0, %v308
    %v587 = vsel %vm448, 0.0, %v309
    %v588 = vsel %vm449, 0.0, %v310
    %v589 = vsel %vm450, 0.0, %v311
    %v590 = vsel %vm451, 0.0, %v312
    %v591 = vsel %vm452, 0.0, %v313
    %v592 = vsel %vm453, 0.0, %v314
    %v593 = vsel %vm454, 0.0, %v315
    %v594 = vsel %vm455, 0.0, %v316
    %v595 = vsel %vm456, 0.0, %v317
    %v596 = vsel %vm457, 0.0, %v318
    %v597 = vsel %vm458, 0.0, %v319
    %v598 = vsel %vm459, 0.0, %v320
    %v599 = vsel %vm460, 0.0, %v321
    %v600 = vsub.f32 %v44, %v461
    %v601 = vsub.f32 %v45, %v462
    %v602 = vsub.f32 %v46, %v463
    %v603 = vsub.f32 %v47, %v464
    %v604 = vsub.f32 %v48, %v465
    %v605 = vsub.f32 %v49, %v466
    %v606 = vsub.f32 %v50, %v467
    %v607 = vsub.f32 %v51, %v468
    %v608 = vsub.f32 %v52, %v469
    %v609 = vsub.f32 %v53, %v470
    %v610 = vsub.f32 %v54, %v471
    %v611 = vsub.f32 %v55, %v472
    %v612 = vsub.f32 %v56, %v473
    %v613 = vsub.f32 %v57, %v474
    %v614 = vsub.f32 %v58, %v475
    %v615 = vsub.f32 %v59, %v476
    %v616 = vsub.f32 %v60, %v477
    %v617 = vsub.f32 %v61, %v478
    %v618 = vsub.f32 %v62, %v479
    %v619 = vsub.f32 %v63, %v480
    %v620 = vsub.f32 %v64, %v481
    %v621 = vsub.f32 %v65, %v482
    %v622 = vsub.f32 %v66, %v483
    %v623 = vsub.f32 %v67, %v484
    %v624 = vsub.f32 %v68, %v485
    %v625 = vsub.f32 %v69, %v486
    %v626 = vsub.f32 %v70, %v487
    %v627 = vsub.f32 %v71, %v488
    %v628 = vsub.f32 %v72, %v489
    %v629 = vsub.f32 %v73, %v490
    %v630 = vsub.f32 %v74, %v491
    %v631 = vsub.f32 %v75, %v492
    %v632 = vsub.f32 %v76, %v493
    %v633 = vsub.f32 %v77, %v494
    %v634 = vsub.f32 %v78, %v495
    %v635 = vsub.f32 %v79, %v496
    %v636 = vsub.f32 %v80, %v497
    %v637 = vsub.f32 %v81, %v498
    %v638 = vsub.f32 %v82, %v499
    %v639 = vsub.f32 %v83, %v500
    %v640 = vsub.f32 %v84, %v501
    %v641 = vsub.f32 %v85, %v502
    %v642 = vsub.f32 %v86, %v503
    %v643 = vsub.f32 %v87, %v504
    %v644 = vsub.f32 %v88, %v505
    %v645 = vsub.f32 %v89, %v506
    %v646 = vsub.f32 %v90, %v507
    %v647 = vsub.f32 %v91, %v508
    %v648 = vsub.f32 %v92, %v509
    %v649 = vsub.f32 %v93, %v510
    %v650 = vsub.f32 %v94, %v511
    %v651 = vsub.f32 %v95, %v512
    %v652 = vsub.f32 %v96, %v513
    %v653 = vsub.f32 %v97, %v514
    %v654 = vsub.f32 %v98, %v515
    %v655 = vsub.f32 %v99, %v516
    %v656 = vsub.f32 %v100, %v517
    %v657 = vsub.f32 %v101, %v518
    %v658 = vsub.f32 %v102, %v519
    %v659 = vsub.f32 %v103, %v520
    %v660 = vsub.f32 %v104, %v521
    %v661 = vsub.f32 %v105, %v522
    %v662 = vsub.f32 %v106, %v523
    %v663 = vsub.f32 %v107, %v524
    %v664 = vsub.f32 %v108, %v525
    %v665 = vsub.f32 %v109, %v526
    %v666 = vsub.f32 %v110, %v527
    %v667 = vsub.f32 %v111, %v528
    %v668 = vsub.f32 %v112, %v529
    %v669 = vsub.f32 %v113, %v530
    %v670 = vsub.f32 %v114, %v531
    %v671 = vsub.f32 %v115, %v532
    %v672 = vsub.f32 %v116, %v533
    %v673 = vsub.f32 %v117, %v534
    %v674 = vsub.f32 %v118, %v535
    %v675 = vsub.f32 %v119, %v536
    %v676 = vsub.f32 %v120, %v537
    %v677 = vsub.f32 %v121, %v538
    %v678 = vsub.f32 %v122, %v539
    %v679 = vsub.f32 %v123, %v540
    %v680 = vsub.f32 %v124, %v541
    %v681 = vsub.f32 %v125, %v542
    %v682 = vsub.f32 %v126, %v543
    %v683 = vsub.f32 %v127, %v544
    %v684 = vsub.f32 %v128, %v545
    %v685 = vsub.f32 %v129, %v546
    %v686 = vsub.f32 %v130, %v547
    %v687 = vsub.f32 %v131, %v548
    %v688 = vsub.f32 %v132, %v549
    %v689 = vsub.f32 %v133, %v550
    %v690 = vsub.f32 %v134, %v551
    %v691 = vsub.f32 %v135, %v552
    %v692 = vsub.f32 %v136, %v553
    %v693 = vsub.f32 %v137, %v554
    %v694 = vsub.f32 %v138, %v555
    %v695 = vsub.f32 %v139, %v556
    %v696 = vsub.f32 %v140, %v557
    %v697 = vsub.f32 %v141, %v558
    %v698 = vsub.f32 %v142, %v559
    %v699 = vsub.f32 %v143, %v560
    %v700 = vsub.f32 %v144, %v561
    %v701 = vsub.f32 %v145, %v562
    %v702 = vsub.f32 %v146, %v563
    %v703 = vsub.f32 %v147, %v564
    %v704 = vsub.f32 %v148, %v565
    %v705 = vsub.f32 %v149, %v566
    %v706 = vsub.f32 %v150, %v567
    %v707 = vsub.f32 %v151, %v568
    %v708 = vsub.f32 %v152, %v569
    %v709 = vsub.f32 %v153, %v570
    %v710 = vsub.f32 %v154, %v571
    %v711 = vsub.f32 %v155, %v572
    %v712 = vsub.f32 %v156, %v573
    %v713 = vsub.f32 %v157, %v574
    %v714 = vsub.f32 %v158, %v575
    %v715 = vsub.f32 %v159, %v576
    %v716 = vsub.f32 %v160, %v577
    %v717 = vsub.f32 %v161, %v578
    %v718 = vsub.f32 %v162, %v579
    %v719 = vsub.f32 %v163, %v580
    %v720 = vsub.f32 %v164, %v581
    %v721 = vsub.f32 %v165, %v582
    %v722 = vsub.f32 %v166, %v583
    %v723 = vsub.f32 %v167, %v584
    %v724 = vsub.f32 %v168, %v585
    %v725 = vsub.f32 %v169, %v586
    %v726 = vsub.f32 %v170, %v587
    %v727 = vsub.f32 %v171, %v588
    %v728 = vsub.f32 %v172, %v589
    %v729 = vsub.f32 %v173, %v590
    %v730 = vsub.f32 %v174, %v591
    %v731 = vsub.f32 %v175, %v592
    %v732 = vsub.f32 %v176, %v593
    %v733 = vsub.f32 %v177, %v594
    %v734 = vsub.f32 %v178, %v595
    %v735 = vsub.f32 %v179, %v596
    %v736 = vsub.f32 %v180, %v597
    %v737 = vsub.f32 %v181, %v598
    %v738 = vsub.f32 %v182, %v599
    %v739 = vand.u32 2147483647, %v600
    %v740 = vand.u32 2147483647, %v601
    %v741 = vand.u32 2147483647, %v602
    %v742 = vand.u32 2147483647, %v603
    %v743 = vand.u32 2147483647, %v604
    %v744 = vand.u32 2147483647, %v605
    %v745 = vand.u32 2147483647, %v606
    %v746 = vand.u32 2147483647, %v607
    %v747 = vand.u32 2147483647, %v608
    %v748 = vand.u32 2147483647, %v609
    %v749 = vand.u32 2147483647, %v610
    %v750 = vand.u32 2147483647, %v611
    %v751 = vand.u32 2147483647, %v612
    %v752 = vand.u32 2147483647, %v613
    %v753 = vand.u32 2147483647, %v614
    %v754 = vand.u32 2147483647, %v615
    %v755 = vand.u32 2147483647, %v616
    %v756 = vand.u32 2147483647, %v617
    %v757 = vand.u32 2147483647, %v618
    %v758 = vand.u32 2147483647, %v619
    %v759 = vand.u32 2147483647, %v620
    %v760 = vand.u32 2147483647, %v621
    %v761 = vand.u32 2147483647, %v622
    %v762 = vand.u32 2147483647, %v623
    %v763 = vand.u32 2147483647, %v624
    %v764 = vand.u32 2147483647, %v625
    %v765 = vand.u32 2147483647, %v626
    %v766 = vand.u32 2147483647, %v627
    %v767 = vand.u32 2147483647, %v628
    %v768 = vand.u32 2147483647, %v629
    %v769 = vand.u32 2147483647, %v630
    %v770 = vand.u32 2147483647, %v631
    %v771 = vand.u32 2147483647, %v632
    %v772 = vand.u32 2147483647, %v633
    %v773 = vand.u32 2147483647, %v634
    %v774 = vand.u32 2147483647, %v635
    %v775 = vand.u32 2147483647, %v636
    %v776 = vand.u32 2147483647, %v637
    %v777 = vand.u32 2147483647, %v638
    %v778 = vand.u32 2147483647, %v639
    %v779 = vand.u32 2147483647, %v640
    %v780 = vand.u32 2147483647, %v641
    %v781 = vand.u32 2147483647, %v642
    %v782 = vand.u32 2147483647, %v643
    %v783 = vand.u32 2147483647, %v644
    %v784 = vand.u32 2147483647, %v645
    %v785 = vand.u32 2147483647, %v646
    %v786 = vand.u32 2147483647, %v647
    %v787 = vand.u32 2147483647, %v648
    %v788 = vand.u32 2147483647, %v649
    %v789 = vand.u32 2147483647, %v650
    %v790 = vand.u32 2147483647, %v651
    %v791 = vand.u32 2147483647, %v652
    %v792 = vand.u32 2147483647, %v653
    %v793 = vand.u32 2147483647, %v654
    %v794 = vand.u32 2147483647, %v655
    %v795 = vand.u32 2147483647, %v656
    %v796 = vand.u32 2147483647, %v657
    %v797 = vand.u32 2147483647, %v658
    %v798 = vand.u32 2147483647, %v659
    %v799 = vand.u32 2147483647, %v660
    %v800 = vand.u32 2147483647, %v661
    %v801 = vand.u32 2147483647, %v662
    %v802 = vand.u32 2147483647, %v663
    %v803 = vand.u32 2147483647, %v664
    %v804 = vand.u32 2147483647, %v665
    %v805 = vand.u32 2147483647, %v666
    %v806 = vand.u32 2147483647, %v667
    %v807 = vand.u32 2147483647, %v668
    %v808 = vand.u32 2147483647, %v669
    %v809 = vand.u32 2147483647, %v670
    %v810 = vand.u32 2147483647, %v671
    %v811 = vand.u32 2147483647, %v672
    %v812 = vand.u32 2147483647, %v673
    %v813 = vand.u32 2147483647, %v674
    %v814 = vand.u32 2147483647, %v675
    %v815 = vand.u32 2147483647, %v676
    %v816 = vand.u32 2147483647, %v677
    %v817 = vand.u32 2147483647, %v678
    %v818 = vand.u32 2147483647, %v679
    %v819 = vand.u32 2147483647, %v680
    %v820 = vand.u32 2147483647, %v681
    %v821 = vand.u32 2147483647, %v682
    %v822 = vand.u32 2147483647, %v683
    %v823 = vand.u32 2147483647, %v684
    %v824 = vand.u32 2147483647, %v685
    %v825 = vand.u32 2147483647, %v686
    %v826 = vand.u32 2147483647, %v687
    %v827 = vand.u32 2147483647, %v688
    %v828 = vand.u32 2147483647, %v689
    %v829 = vand.u32 2147483647, %v690
    %v830 = vand.u32 2147483647, %v691
    %v831 = vand.u32 2147483647, %v692
    %v832 = vand.u32 2147483647, %v693
    %v833 = vand.u32 2147483647, %v694
    %v834 = vand.u32 2147483647, %v695
    %v835 = vand.u32 2147483647, %v696
    %v836 = vand.u32 2147483647, %v697
    %v837 = vand.u32 2147483647, %v698
    %v838 = vand.u32 2147483647, %v699
    %v839 = vand.u32 2147483647, %v700
    %v840 = vand.u32 2147483647, %v701
    %v841 = vand.u32 2147483647, %v702
    %v842 = vand.u32 2147483647, %v703
    %v843 = vand.u32 2147483647, %v704
    %v844 = vand.u32 2147483647, %v705
    %v845 = vand.u32 2147483647, %v706
    %v846 = vand.u32 2147483647, %v707
    %v847 = vand.u32 2147483647, %v708
    %v848 = vand.u32 2147483647, %v709
    %v849 = vand.u32 2147483647, %v710
    %v850 = vand.u32 2147483647, %v711
    %v851 = vand.u32 2147483647, %v712
    %v852 = vand.u32 2147483647, %v713
    %v853 = vand.u32 2147483647, %v714
    %v854 = vand.u32 2147483647, %v715
    %v855 = vand.u32 2147483647, %v716
    %v856 = vand.u32 2147483647, %v717
    %v857 = vand.u32 2147483647, %v718
    %v858 = vand.u32 2147483647, %v719
    %v859 = vand.u32 2147483647, %v720
    %v860 = vand.u32 2147483647, %v721
    %v861 = vand.u32 2147483647, %v722
    %v862 = vand.u32 2147483647, %v723
    %v863 = vand.u32 2147483647, %v724
    %v864 = vand.u32 2147483647, %v725
    %v865 = vand.u32 2147483647, %v726
    %v866 = vand.u32 2147483647, %v727
    %v867 = vand.u32 2147483647, %v728
    %v868 = vand.u32 2147483647, %v729
    %v869 = vand.u32 2147483647, %v730
    %v870 = vand.u32 2147483647, %v731
    %v871 = vand.u32 2147483647, %v732
    %v872 = vand.u32 2147483647, %v733
    %v873 = vand.u32 2147483647, %v734
    %v874 = vand.u32 2147483647, %v735
    %v875 = vand.u32 2147483647, %v736
    %v876 = vand.u32 2147483647, %v737
    %v877 = vand.u32 2147483647, %v738
    %vm878 = vcmp.lt.f32.partialorder %v739, 1.0
    %vm879 = vcmp.lt.f32.partialorder %v740, 1.0
    %vm880 = vcmp.lt.f32.partialorder %v741, 1.0
    %vm881 = vcmp.lt.f32.partialorder %v742, 1.0
    %vm882 = vcmp.lt.f32.partialorder %v743, 1.0
    %vm883 = vcmp.lt.f32.partialorder %v744, 1.0
    %vm884 = vcmp.lt.f32.partialorder %v745, 1.0
    %vm885 = vcmp.lt.f32.partialorder %v746, 1.0
    %vm886 = vcmp.lt.f32.partialorder %v747, 1.0
    %vm887 = vcmp.lt.f32.partialorder %v748, 1.0
    %vm888 = vcmp.lt.f32.partialorder %v749, 1.0
    %vm889 = vcmp.lt.f32.partialorder %v750, 1.0
    %vm890 = vcmp.lt.f32.partialorder %v751, 1.0
    %vm891 = vcmp.lt.f32.partialorder %v752, 1.0
    %vm892 = vcmp.lt.f32.partialorder %v753, 1.0
    %vm893 = vcmp.lt.f32.partialorder %v754, 1.0
    %vm894 = vcmp.lt.f32.partialorder %v755, 1.0
    %vm895 = vcmp.lt.f32.partialorder %v756, 1.0
    %vm896 = vcmp.lt.f32.partialorder %v757, 1.0
    %vm897 = vcmp.lt.f32.partialorder %v758, 1.0
    %vm898 = vcmp.lt.f32.partialorder %v759, 1.0
    %vm899 = vcmp.lt.f32.partialorder %v760, 1.0
    %vm900 = vcmp.lt.f32.partialorder %v761, 1.0
    %vm901 = vcmp.lt.f32.partialorder %v762, 1.0
    %vm902 = vcmp.lt.f32.partialorder %v763, 1.0
    %vm903 = vcmp.lt.f32.partialorder %v764, 1.0
    %vm904 = vcmp.lt.f32.partialorder %v765, 1.0
    %vm905 = vcmp.lt.f32.partialorder %v766, 1.0
    %vm906 = vcmp.lt.f32.partialorder %v767, 1.0
    %vm907 = vcmp.lt.f32.partialorder %v768, 1.0
    %vm908 = vcmp.lt.f32.partialorder %v769, 1.0
    %vm909 = vcmp.lt.f32.partialorder %v770, 1.0
    %vm910 = vcmp.lt.f32.partialorder %v771, 1.0
    %vm911 = vcmp.lt.f32.partialorder %v772, 1.0
    %vm912 = vcmp.lt.f32.partialorder %v773, 1.0
    %vm913 = vcmp.lt.f32.partialorder %v774, 1.0
    %vm914 = vcmp.lt.f32.partialorder %v775, 1.0
    %vm915 = vcmp.lt.f32.partialorder %v776, 1.0
    %vm916 = vcmp.lt.f32.partialorder %v777, 1.0
    %vm917 = vcmp.lt.f32.partialorder %v778, 1.0
    %vm918 = vcmp.lt.f32.partialorder %v779, 1.0
    %vm919 = vcmp.lt.f32.partialorder %v780, 1.0
    %vm920 = vcmp.lt.f32.partialorder %v781, 1.0
    %vm921 = vcmp.lt.f32.partialorder %v782, 1.0
    %vm922 = vcmp.lt.f32.partialorder %v783, 1.0
    %vm923 = vcmp.lt.f32.partialorder %v784, 1.0
    %vm924 = vcmp.lt.f32.partialorder %v785, 1.0
    %vm925 = vcmp.lt.f32.partialorder %v786, 1.0
    %vm926 = vcmp.lt.f32.partialorder %v787, 1.0
    %vm927 = vcmp.lt.f32.partialorder %v788, 1.0
    %vm928 = vcmp.lt.f32.partialorder %v789, 1.0
    %vm929 = vcmp.lt.f32.partialorder %v790, 1.0
    %vm930 = vcmp.lt.f32.partialorder %v791, 1.0
    %vm931 = vcmp.lt.f32.partialorder %v792, 1.0
    %vm932 = vcmp.lt.f32.partialorder %v793, 1.0
    %vm933 = vcmp.lt.f32.partialorder %v794, 1.0
    %vm934 = vcmp.lt.f32.partialorder %v795, 1.0
    %vm935 = vcmp.lt.f32.partialorder %v796, 1.0
    %vm936 = vcmp.lt.f32.partialorder %v797, 1.0
    %vm937 = vcmp.lt.f32.partialorder %v798, 1.0
    %vm938 = vcmp.lt.f32.partialorder %v799, 1.0
    %vm939 = vcmp.lt.f32.partialorder %v800, 1.0
    %vm940 = vcmp.lt.f32.partialorder %v801, 1.0
    %vm941 = vcmp.lt.f32.partialorder %v802, 1.0
    %vm942 = vcmp.lt.f32.partialorder %v803, 1.0
    %vm943 = vcmp.lt.f32.partialorder %v804, 1.0
    %vm944 = vcmp.lt.f32.partialorder %v805, 1.0
    %vm945 = vcmp.lt.f32.partialorder %v806, 1.0
    %vm946 = vcmp.lt.f32.partialorder %v807, 1.0
    %vm947 = vcmp.lt.f32.partialorder %v808, 1.0
    %vm948 = vcmp.lt.f32.partialorder %v809, 1.0
    %vm949 = vcmp.lt.f32.partialorder %v810, 1.0
    %vm950 = vcmp.lt.f32.partialorder %v811, 1.0
    %vm951 = vcmp.lt.f32.partialorder %v812, 1.0
    %vm952 = vcmp.lt.f32.partialorder %v813, 1.0
    %vm953 = vcmp.lt.f32.partialorder %v814, 1.0
    %vm954 = vcmp.lt.f32.partialorder %v815, 1.0
    %vm955 = vcmp.lt.f32.partialorder %v816, 1.0
    %vm956 = vcmp.lt.f32.partialorder %v817, 1.0
    %vm957 = vcmp.lt.f32.partialorder %v818, 1.0
    %vm958 = vcmp.lt.f32.partialorder %v819, 1.0
    %vm959 = vcmp.lt.f32.partialorder %v820, 1.0
    %vm960 = vcmp.lt.f32.partialorder %v821, 1.0
    %vm961 = vcmp.lt.f32.partialorder %v822, 1.0
    %vm962 = vcmp.lt.f32.partialorder %v823, 1.0
    %vm963 = vcmp.lt.f32.partialorder %v824, 1.0
    %vm964 = vcmp.lt.f32.partialorder %v825, 1.0
    %vm965 = vcmp.lt.f32.partialorder %v826, 1.0
    %vm966 = vcmp.lt.f32.partialorder %v827, 1.0
    %vm967 = vcmp.lt.f32.partialorder %v828, 1.0
    %vm968 = vcmp.lt.f32.partialorder %v829, 1.0
    %vm969 = vcmp.lt.f32.partialorder %v830, 1.0
    %vm970 = vcmp.lt.f32.partialorder %v831, 1.0
    %vm971 = vcmp.lt.f32.partialorder %v832, 1.0
    %vm972 = vcmp.lt.f32.partialorder %v833, 1.0
    %vm973 = vcmp.lt.f32.partialorder %v834, 1.0
    %vm974 = vcmp.lt.f32.partialorder %v835, 1.0
    %vm975 = vcmp.lt.f32.partialorder %v836, 1.0
    %vm976 = vcmp.lt.f32.partialorder %v837, 1.0
    %vm977 = vcmp.lt.f32.partialorder %v838, 1.0
    %vm978 = vcmp.lt.f32.partialorder %v839, 1.0
    %vm979 = vcmp.lt.f32.partialorder %v840, 1.0
    %vm980 = vcmp.lt.f32.partialorder %v841, 1.0
    %vm981 = vcmp.lt.f32.partialorder %v842, 1.0
    %vm982 = vcmp.lt.f32.partialorder %v843, 1.0
    %vm983 = vcmp.lt.f32.partialorder %v844, 1.0
    %vm984 = vcmp.lt.f32.partialorder %v845, 1.0
    %vm985 = vcmp.lt.f32.partialorder %v846, 1.0
    %vm986 = vcmp.lt.f32.partialorder %v847, 1.0
    %vm987 = vcmp.lt.f32.partialorder %v848, 1.0
    %vm988 = vcmp.lt.f32.partialorder %v849, 1.0
    %vm989 = vcmp.lt.f32.partialorder %v850, 1.0
    %vm990 = vcmp.lt.f32.partialorder %v851, 1.0
    %vm991 = vcmp.lt.f32.partialorder %v852, 1.0
    %vm992 = vcmp.lt.f32.partialorder %v853, 1.0
    %vm993 = vcmp.lt.f32.partialorder %v854, 1.0
    %vm994 = vcmp.lt.f32.partialorder %v855, 1.0
    %vm995 = vcmp.lt.f32.partialorder %v856, 1.0
    %vm996 = vcmp.lt.f32.partialorder %v857, 1.0
    %vm997 = vcmp.lt.f32.partialorder %v858, 1.0
    %vm998 = vcmp.lt.f32.partialorder %v859, 1.0
    %vm999 = vcmp.lt.f32.partialorder %v860, 1.0
    %vm1000 = vcmp.lt.f32.partialorder %v861, 1.0
    %vm1001 = vcmp.lt.f32.partialorder %v862, 1.0
    %vm1002 = vcmp.lt.f32.partialorder %v863, 1.0
    %vm1003 = vcmp.lt.f32.partialorder %v864, 1.0
    %vm1004 = vcmp.lt.f32.partialorder %v865, 1.0
    %vm1005 = vcmp.lt.f32.partialorder %v866, 1.0
    %vm1006 = vcmp.lt.f32.partialorder %v867, 1.0
    %vm1007 = vcmp.lt.f32.partialorder %v868, 1.0
    %vm1008 = vcmp.lt.f32.partialorder %v869, 1.0
    %vm1009 = vcmp.lt.f32.partialorder %v870, 1.0
    %vm1010 = vcmp.lt.f32.partialorder %v871, 1.0
    %vm1011 = vcmp.lt.f32.partialorder %v872, 1.0
    %vm1012 = vcmp.lt.f32.partialorder %v873, 1.0
    %vm1013 = vcmp.lt.f32.partialorder %v874, 1.0
    %vm1014 = vcmp.lt.f32.partialorder %v875, 1.0
    %vm1015 = vcmp.lt.f32.partialorder %v876, 1.0
    %vm1016 = vcmp.lt.f32.partialorder %v877, 1.0
    %v1017 = vmul.f32 %v739, %v739
    %v1018 = vmul.f32 %v740, %v740
    %v1019 = vmul.f32 %v741, %v741
    %v1020 = vmul.f32 %v742, %v742
    %v1021 = vmul.f32 %v743, %v743
    %v1022 = vmul.f32 %v744, %v744
    %v1023 = vmul.f32 %v745, %v745
    %v1024 = vmul.f32 %v746, %v746
    %v1025 = vmul.f32 %v747, %v747
    %v1026 = vmul.f32 %v748, %v748
    %v1027 = vmul.f32 %v749, %v749
    %v1028 = vmul.f32 %v750, %v750
    %v1029 = vmul.f32 %v751, %v751
    %v1030 = vmul.f32 %v752, %v752
    %v1031 = vmul.f32 %v753, %v753
    %v1032 = vmul.f32 %v754, %v754
    %v1033 = vmul.f32 %v755, %v755
    %v1034 = vmul.f32 %v756, %v756
    %v1035 = vmul.f32 %v757, %v757
    %v1036 = vmul.f32 %v758, %v758
    %v1037 = vmul.f32 %v759, %v759
    %v1038 = vmul.f32 %v760, %v760
    %v1039 = vmul.f32 %v761, %v761
    %v1040 = vmul.f32 %v762, %v762
    %v1041 = vmul.f32 %v763, %v763
    %v1042 = vmul.f32 %v764, %v764
    %v1043 = vmul.f32 %v765, %v765
    %v1044 = vmul.f32 %v766, %v766
    %v1045 = vmul.f32 %v767, %v767
    %v1046 = vmul.f32 %v768, %v768
    %v1047 = vmul.f32 %v769, %v769
    %v1048 = vmul.f32 %v770, %v770
    %v1049 = vmul.f32 %v771, %v771
    %v1050 = vmul.f32 %v772, %v772
    %v1051 = vmul.f32 %v773, %v773
    %v1052 = vmul.f32 %v774, %v774
    %v1053 = vmul.f32 %v775, %v775
    %v1054 = vmul.f32 %v776, %v776
    %v1055 = vmul.f32 %v777, %v777
    %v1056 = vmul.f32 %v778, %v778
    %v1057 = vmul.f32 %v779, %v779
    %v1058 = vmul.f32 %v780, %v780
    %v1059 = vmul.f32 %v781, %v781
    %v1060 = vmul.f32 %v782, %v782
    %v1061 = vmul.f32 %v783, %v783
    %v1062 = vmul.f32 %v784, %v784
    %v1063 = vmul.f32 %v785, %v785
    %v1064 = vmul.f32 %v786, %v786
    %v1065 = vmul.f32 %v787, %v787
    %v1066 = vmul.f32 %v788, %v788
    %v1067 = vmul.f32 %v789, %v789
    %v1068 = vmul.f32 %v790, %v790
    %v1069 = vmul.f32 %v791, %v791
    %v1070 = vmul.f32 %v792, %v792
    %v1071 = vmul.f32 %v793, %v793
    %v1072 = vmul.f32 %v794, %v794
    %v1073 = vmul.f32 %v795, %v795
    %v1074 = vmul.f32 %v796, %v796
    %v1075 = vmul.f32 %v797, %v797
    %v1076 = vmul.f32 %v798, %v798
    %v1077 = vmul.f32 %v799, %v799
    %v1078 = vmul.f32 %v800, %v800
    %v1079 = vmul.f32 %v801, %v801
    %v1080 = vmul.f32 %v802, %v802
    %v1081 = vmul.f32 %v803, %v803
    %v1082 = vmul.f32 %v804, %v804
    %v1083 = vmul.f32 %v805, %v805
    %v1084 = vmul.f32 %v806, %v806
    %v1085 = vmul.f32 %v807, %v807
    %v1086 = vmul.f32 %v808, %v808
    %v1087 = vmul.f32 %v809, %v809
    %v1088 = vmul.f32 %v810, %v810
    %v1089 = vmul.f32 %v811, %v811
    %v1090 = vmul.f32 %v812, %v812
    %v1091 = vmul.f32 %v813, %v813
    %v1092 = vmul.f32 %v814, %v814
    %v1093 = vmul.f32 %v815, %v815
    %v1094 = vmul.f32 %v816, %v816
    %v1095 = vmul.f32 %v817, %v817
    %v1096 = vmul.f32 %v818, %v818
    %v1097 = vmul.f32 %v819, %v819
    %v1098 = vmul.f32 %v820, %v820
    %v1099 = vmul.f32 %v821, %v821
    %v1100 = vmul.f32 %v822, %v822
    %v1101 = vmul.f32 %v823, %v823
    %v1102 = vmul.f32 %v824, %v824
    %v1103 = vmul.f32 %v825, %v825
    %v1104 = vmul.f32 %v826, %v826
    %v1105 = vmul.f32 %v827, %v827
    %v1106 = vmul.f32 %v828, %v828
    %v1107 = vmul.f32 %v829, %v829
    %v1108 = vmul.f32 %v830, %v830
    %v1109 = vmul.f32 %v831, %v831
    %v1110 = vmul.f32 %v832, %v832
    %v1111 = vmul.f32 %v833, %v833
    %v1112 = vmul.f32 %v834, %v834
    %v1113 = vmul.f32 %v835, %v835
    %v1114 = vmul.f32 %v836, %v836
    %v1115 = vmul.f32 %v837, %v837
    %v1116 = vmul.f32 %v838, %v838
    %v1117 = vmul.f32 %v839, %v839
    %v1118 = vmul.f32 %v840, %v840
    %v1119 = vmul.f32 %v841, %v841
    %v1120 = vmul.f32 %v842, %v842
    %v1121 = vmul.f32 %v843, %v843
    %v1122 = vmul.f32 %v844, %v844
    %v1123 = vmul.f32 %v845, %v845
    %v1124 = vmul.f32 %v846, %v846
    %v1125 = vmul.f32 %v847, %v847
    %v1126 = vmul.f32 %v848, %v848
    %v1127 = vmul.f32 %v849, %v849
    %v1128 = vmul.f32 %v850, %v850
    %v1129 = vmul.f32 %v851, %v851
    %v1130 = vmul.f32 %v852, %v852
    %v1131 = vmul.f32 %v853, %v853
    %v1132 = vmul.f32 %v854, %v854
    %v1133 = vmul.f32 %v855, %v855
    %v1134 = vmul.f32 %v856, %v856
    %v1135 = vmul.f32 %v857, %v857
    %v1136 = vmul.f32 %v858, %v858
    %v1137 = vmul.f32 %v859, %v859
    %v1138 = vmul.f32 %v860, %v860
    %v1139 = vmul.f32 %v861, %v861
    %v1140 = vmul.f32 %v862, %v862
    %v1141 = vmul.f32 %v863, %v863
    %v1142 = vmul.f32 %v864, %v864
    %v1143 = vmul.f32 %v865, %v865
    %v1144 = vmul.f32 %v866, %v866
    %v1145 = vmul.f32 %v867, %v867
    %v1146 = vmul.f32 %v868, %v868
    %v1147 = vmul.f32 %v869, %v869
    %v1148 = vmul.f32 %v870, %v870
    %v1149 = vmul.f32 %v871, %v871
    %v1150 = vmul.f32 %v872, %v872
    %v1151 = vmul.f32 %v873, %v873
    %v1152 = vmul.f32 %v874, %v874
    %v1153 = vmul.f32 %v875, %v875
    %v1154 = vmul.f32 %v876, %v876
    %v1155 = vmul.f32 %v877, %v877
    %v1156 = vmul.f32 %v1017, 0.5
    %v1157 = vmul.f32 %v1018, 0.5
    %v1158 = vmul.f32 %v1019, 0.5
    %v1159 = vmul.f32 %v1020, 0.5
    %v1160 = vmul.f32 %v1021, 0.5
    %v1161 = vmul.f32 %v1022, 0.5
    %v1162 = vmul.f32 %v1023, 0.5
    %v1163 = vmul.f32 %v1024, 0.5
    %v1164 = vmul.f32 %v1025, 0.5
    %v1165 = vmul.f32 %v1026, 0.5
    %v1166 = vmul.f32 %v1027, 0.5
    %v1167 = vmul.f32 %v1028, 0.5
    %v1168 = vmul.f32 %v1029, 0.5
    %v1169 = vmul.f32 %v1030, 0.5
    %v1170 = vmul.f32 %v1031, 0.5
    %v1171 = vmul.f32 %v1032, 0.5
    %v1172 = vmul.f32 %v1033, 0.5
    %v1173 = vmul.f32 %v1034, 0.5
    %v1174 = vmul.f32 %v1035, 0.5
    %v1175 = vmul.f32 %v1036, 0.5
    %v1176 = vmul.f32 %v1037, 0.5
    %v1177 = vmul.f32 %v1038, 0.5
    %v1178 = vmul.f32 %v1039, 0.5
    %v1179 = vmul.f32 %v1040, 0.5
    %v1180 = vmul.f32 %v1041, 0.5
    %v1181 = vmul.f32 %v1042, 0.5
    %v1182 = vmul.f32 %v1043, 0.5
    %v1183 = vmul.f32 %v1044, 0.5
    %v1184 = vmul.f32 %v1045, 0.5
    %v1185 = vmul.f32 %v1046, 0.5
    %v1186 = vmul.f32 %v1047, 0.5
    %v1187 = vmul.f32 %v1048, 0.5
    %v1188 = vmul.f32 %v1049, 0.5
    %v1189 = vmul.f32 %v1050, 0.5
    %v1190 = vmul.f32 %v1051, 0.5
    %v1191 = vmul.f32 %v1052, 0.5
    %v1192 = vmul.f32 %v1053, 0.5
    %v1193 = vmul.f32 %v1054, 0.5
    %v1194 = vmul.f32 %v1055, 0.5
    %v1195 = vmul.f32 %v1056, 0.5
    %v1196 = vmul.f32 %v1057, 0.5
    %v1197 = vmul.f32 %v1058, 0.5
    %v1198 = vmul.f32 %v1059, 0.5
    %v1199 = vmul.f32 %v1060, 0.5
    %v1200 = vmul.f32 %v1061, 0.5
    %v1201 = vmul.f32 %v1062, 0.5
    %v1202 = vmul.f32 %v1063, 0.5
    %v1203 = vmul.f32 %v1064, 0.5
    %v1204 = vmul.f32 %v1065, 0.5
    %v1205 = vmul.f32 %v1066, 0.5
    %v1206 = vmul.f32 %v1067, 0.5
    %v1207 = vmul.f32 %v1068, 0.5
    %v1208 = vmul.f32 %v1069, 0.5
    %v1209 = vmul.f32 %v1070, 0.5
    %v1210 = vmul.f32 %v1071, 0.5
    %v1211 = vmul.f32 %v1072, 0.5
    %v1212 = vmul.f32 %v1073, 0.5
    %v1213 = vmul.f32 %v1074, 0.5
    %v1214 = vmul.f32 %v1075, 0.5
    %v1215 = vmul.f32 %v1076, 0.5
    %v1216 = vmul.f32 %v1077, 0.5
    %v1217 = vmul.f32 %v1078, 0.5
    %v1218 = vmul.f32 %v1079, 0.5
    %v1219 = vmul.f32 %v1080, 0.5
    %v1220 = vmul.f32 %v1081, 0.5
    %v1221 = vmul.f32 %v1082, 0.5
    %v1222 = vmul.f32 %v1083, 0.5
    %v1223 = vmul.f32 %v1084, 0.5
    %v1224 = vmul.f32 %v1085, 0.5
    %v1225 = vmul.f32 %v1086, 0.5
    %v1226 = vmul.f32 %v1087, 0.5
    %v1227 = vmul.f32 %v1088, 0.5
    %v1228 = vmul.f32 %v1089, 0.5
    %v1229 = vmul.f32 %v1090, 0.5
    %v1230 = vmul.f32 %v1091, 0.5
    %v1231 = vmul.f32 %v1092, 0.5
    %v1232 = vmul.f32 %v1093, 0.5
    %v1233 = vmul.f32 %v1094, 0.5
    %v1234 = vmul.f32 %v1095, 0.5
    %v1235 = vmul.f32 %v1096, 0.5
    %v1236 = vmul.f32 %v1097, 0.5
    %v1237 = vmul.f32 %v1098, 0.5
    %v1238 = vmul.f32 %v1099, 0.5
    %v1239 = vmul.f32 %v1100, 0.5
    %v1240 = vmul.f32 %v1101, 0.5
    %v1241 = vmul.f32 %v1102, 0.5
    %v1242 = vmul.f32 %v1103, 0.5
    %v1243 = vmul.f32 %v1104, 0.5
    %v1244 = vmul.f32 %v1105, 0.5
    %v1245 = vmul.f32 %v1106, 0.5
    %v1246 = vmul.f32 %v1107, 0.5
    %v1247 = vmul.f32 %v1108, 0.5
    %v1248 = vmul.f32 %v1109, 0.5
    %v1249 = vmul.f32 %v1110, 0.5
    %v1250 = vmul.f32 %v1111, 0.5
    %v1251 = vmul.f32 %v1112, 0.5
    %v1252 = vmul.f32 %v1113, 0.5
    %v1253 = vmul.f32 %v1114, 0.5
    %v1254 = vmul.f32 %v1115, 0.5
    %v1255 = vmul.f32 %v1116, 0.5
    %v1256 = vmul.f32 %v1117, 0.5
    %v1257 = vmul.f32 %v1118, 0.5
    %v1258 = vmul.f32 %v1119, 0.5
    %v1259 = vmul.f32 %v1120, 0.5
    %v1260 = vmul.f32 %v1121, 0.5
    %v1261 = vmul.f32 %v1122, 0.5
    %v1262 = vmul.f32 %v1123, 0.5
    %v1263 = vmul.f32 %v1124, 0.5
    %v1264 = vmul.f32 %v1125, 0.5
    %v1265 = vmul.f32 %v1126, 0.5
    %v1266 = vmul.f32 %v1127, 0.5
    %v1267 = vmul.f32 %v1128, 0.5
    %v1268 = vmul.f32 %v1129, 0.5
    %v1269 = vmul.f32 %v1130, 0.5
    %v1270 = vmul.f32 %v1131, 0.5
    %v1271 = vmul.f32 %v1132, 0.5
    %v1272 = vmul.f32 %v1133, 0.5
    %v1273 = vmul.f32 %v1134, 0.5
    %v1274 = vmul.f32 %v1135, 0.5
    %v1275 = vmul.f32 %v1136, 0.5
    %v1276 = vmul.f32 %v1137, 0.5
    %v1277 = vmul.f32 %v1138, 0.5
    %v1278 = vmul.f32 %v1139, 0.5
    %v1279 = vmul.f32 %v1140, 0.5
    %v1280 = vmul.f32 %v1141, 0.5
    %v1281 = vmul.f32 %v1142, 0.5
    %v1282 = vmul.f32 %v1143, 0.5
    %v1283 = vmul.f32 %v1144, 0.5
    %v1284 = vmul.f32 %v1145, 0.5
    %v1285 = vmul.f32 %v1146, 0.5
    %v1286 = vmul.f32 %v1147, 0.5
    %v1287 = vmul.f32 %v1148, 0.5
    %v1288 = vmul.f32 %v1149, 0.5
    %v1289 = vmul.f32 %v1150, 0.5
    %v1290 = vmul.f32 %v1151, 0.5
    %v1291 = vmul.f32 %v1152, 0.5
    %v1292 = vmul.f32 %v1153, 0.5
    %v1293 = vmul.f32 %v1154, 0.5
    %v1294 = vmul.f32 %v1155, 0.5
    %v1295 = vsub.f32 %v739, 0.5
    %v1296 = vsub.f32 %v740, 0.5
    %v1297 = vsub.f32 %v741, 0.5
    %v1298 = vsub.f32 %v742, 0.5
    %v1299 = vsub.f32 %v743, 0.5
    %v1300 = vsub.f32 %v744, 0.5
    %v1301 = vsub.f32 %v745, 0.5
    %v1302 = vsub.f32 %v746, 0.5
    %v1303 = vsub.f32 %v747, 0.5
    %v1304 = vsub.f32 %v748, 0.5
    %v1305 = vsub.f32 %v749, 0.5
    %v1306 = vsub.f32 %v750, 0.5
    %v1307 = vsub.f32 %v751, 0.5
    %v1308 = vsub.f32 %v752, 0.5
    %v1309 = vsub.f32 %v753, 0.5
    %v1310 = vsub.f32 %v754, 0.5
    %v1311 = vsub.f32 %v755, 0.5
    %v1312 = vsub.f32 %v756, 0.5
    %v1313 = vsub.f32 %v757, 0.5
    %v1314 = vsub.f32 %v758, 0.5
    %v1315 = vsub.f32 %v759, 0.5
    %v1316 = vsub.f32 %v760, 0.5
    %v1317 = vsub.f32 %v761, 0.5
    %v1318 = vsub.f32 %v762, 0.5
    %v1319 = vsub.f32 %v763, 0.5
    %v1320 = vsub.f32 %v764, 0.5
    %v1321 = vsub.f32 %v765, 0.5
    %v1322 = vsub.f32 %v766, 0.5
    %v1323 = vsub.f32 %v767, 0.5
    %v1324 = vsub.f32 %v768, 0.5
    %v1325 = vsub.f32 %v769, 0.5
    %v1326 = vsub.f32 %v770, 0.5
    %v1327 = vsub.f32 %v771, 0.5
    %v1328 = vsub.f32 %v772, 0.5
    %v1329 = vsub.f32 %v773, 0.5
    %v1330 = vsub.f32 %v774, 0.5
    %v1331 = vsub.f32 %v775, 0.5
    %v1332 = vsub.f32 %v776, 0.5
    %v1333 = vsub.f32 %v777, 0.5
    %v1334 = vsub.f32 %v778, 0.5
    %v1335 = vsub.f32 %v779, 0.5
    %v1336 = vsub.f32 %v780, 0.5
    %v1337 = vsub.f32 %v781, 0.5
    %v1338 = vsub.f32 %v782, 0.5
    %v1339 = vsub.f32 %v783, 0.5
    %v1340 = vsub.f32 %v784, 0.5
    %v1341 = vsub.f32 %v785, 0.5
    %v1342 = vsub.f32 %v786, 0.5
    %v1343 = vsub.f32 %v787, 0.5
    %v1344 = vsub.f32 %v788, 0.5
    %v1345 = vsub.f32 %v789, 0.5
    %v1346 = vsub.f32 %v790, 0.5
    %v1347 = vsub.f32 %v791, 0.5
    %v1348 = vsub.f32 %v792, 0.5
    %v1349 = vsub.f32 %v793, 0.5
    %v1350 = vsub.f32 %v794, 0.5
    %v1351 = vsub.f32 %v795, 0.5
    %v1352 = vsub.f32 %v796, 0.5
    %v1353 = vsub.f32 %v797, 0.5
    %v1354 = vsub.f32 %v798, 0.5
    %v1355 = vsub.f32 %v799, 0.5
    %v1356 = vsub.f32 %v800, 0.5
    %v1357 = vsub.f32 %v801, 0.5
    %v1358 = vsub.f32 %v802, 0.5
    %v1359 = vsub.f32 %v803, 0.5
    %v1360 = vsub.f32 %v804, 0.5
    %v1361 = vsub.f32 %v805, 0.5
    %v1362 = vsub.f32 %v806, 0.5
    %v1363 = vsub.f32 %v807, 0.5
    %v1364 = vsub.f32 %v808, 0.5
    %v1365 = vsub.f32 %v809, 0.5
    %v1366 = vsub.f32 %v810, 0.5
    %v1367 = vsub.f32 %v811, 0.5
    %v1368 = vsub.f32 %v812, 0.5
    %v1369 = vsub.f32 %v813, 0.5
    %v1370 = vsub.f32 %v814, 0.5
    %v1371 = vsub.f32 %v815, 0.5
    %v1372 = vsub.f32 %v816, 0.5
    %v1373 = vsub.f32 %v817, 0.5
    %v1374 = vsub.f32 %v818, 0.5
    %v1375 = vsub.f32 %v819, 0.5
    %v1376 = vsub.f32 %v820, 0.5
    %v1377 = vsub.f32 %v821, 0.5
    %v1378 = vsub.f32 %v822, 0.5
    %v1379 = vsub.f32 %v823, 0.5
    %v1380 = vsub.f32 %v824, 0.5
    %v1381 = vsub.f32 %v825, 0.5
    %v1382 = vsub.f32 %v826, 0.5
    %v1383 = vsub.f32 %v827, 0.5
    %v1384 = vsub.f32 %v828, 0.5
    %v1385 = vsub.f32 %v829, 0.5
    %v1386 = vsub.f32 %v830, 0.5
    %v1387 = vsub.f32 %v831, 0.5
    %v1388 = vsub.f32 %v832, 0.5
    %v1389 = vsub.f32 %v833, 0.5
    %v1390 = vsub.f32 %v834, 0.5
    %v1391 = vsub.f32 %v835, 0.5
    %v1392 = vsub.f32 %v836, 0.5
    %v1393 = vsub.f32 %v837, 0.5
    %v1394 = vsub.f32 %v838, 0.5
    %v1395 = vsub.f32 %v839, 0.5
    %v1396 = vsub.f32 %v840, 0.5
    %v1397 = vsub.f32 %v841, 0.5
    %v1398 = vsub.f32 %v842, 0.5
    %v1399 = vsub.f32 %v843, 0.5
    %v1400 = vsub.f32 %v844, 0.5
    %v1401 = vsub.f32 %v845, 0.5
    %v1402 = vsub.f32 %v846, 0.5
    %v1403 = vsub.f32 %v847, 0.5
    %v1404 = vsub.f32 %v848, 0.5
    %v1405 = vsub.f32 %v849, 0.5
    %v1406 = vsub.f32 %v850, 0.5
    %v1407 = vsub.f32 %v851, 0.5
    %v1408 = vsub.f32 %v852, 0.5
    %v1409 = vsub.f32 %v853, 0.5
    %v1410 = vsub.f32 %v854, 0.5
    %v1411 = vsub.f32 %v855, 0.5
    %v1412 = vsub.f32 %v856, 0.5
    %v1413 = vsub.f32 %v857, 0.5
    %v1414 = vsub.f32 %v858, 0.5
    %v1415 = vsub.f32 %v859, 0.5
    %v1416 = vsub.f32 %v860, 0.5
    %v1417 = vsub.f32 %v861, 0.5
    %v1418 = vsub.f32 %v862, 0.5
    %v1419 = vsub.f32 %v863, 0.5
    %v1420 = vsub.f32 %v864, 0.5
    %v1421 = vsub.f32 %v865, 0.5
    %v1422 = vsub.f32 %v866, 0.5
    %v1423 = vsub.f32 %v867, 0.5
    %v1424 = vsub.f32 %v868, 0.5
    %v1425 = vsub.f32 %v869, 0.5
    %v1426 = vsub.f32 %v870, 0.5
    %v1427 = vsub.f32 %v871, 0.5
    %v1428 = vsub.f32 %v872, 0.5
    %v1429 = vsub.f32 %v873, 0.5
    %v1430 = vsub.f32 %v874, 0.5
    %v1431 = vsub.f32 %v875, 0.5
    %v1432 = vsub.f32 %v876, 0.5
    %v1433 = vsub.f32 %v877, 0.5
    %v1434 = vsel %vm878, %v1156, %v1295
    %v1435 = vsel %vm879, %v1157, %v1296
    %v1436 = vsel %vm880, %v1158, %v1297
    %v1437 = vsel %vm881, %v1159, %v1298
    %v1438 = vsel %vm882, %v1160, %v1299
    %v1439 = vsel %vm883, %v1161, %v1300
    %v1440 = vsel %vm884, %v1162, %v1301
    %v1441 = vsel %vm885, %v1163, %v1302
    %v1442 = vsel %vm886, %v1164, %v1303
    %v1443 = vsel %vm887, %v1165, %v1304
    %v1444 = vsel %vm888, %v1166, %v1305
    %v1445 = vsel %vm889, %v1167, %v1306
    %v1446 = vsel %vm890, %v1168, %v1307
    %v1447 = vsel %vm891, %v1169, %v1308
    %v1448 = vsel %vm892, %v1170, %v1309
    %v1449 = vsel %vm893, %v1171, %v1310
    %v1450 = vsel %vm894, %v1172, %v1311
    %v1451 = vsel %vm895, %v1173, %v1312
    %v1452 = vsel %vm896, %v1174, %v1313
    %v1453 = vsel %vm897, %v1175, %v1314
    %v1454 = vsel %vm898, %v1176, %v1315
    %v1455 = vsel %vm899, %v1177, %v1316
    %v1456 = vsel %vm900, %v1178, %v1317
    %v1457 = vsel %vm901, %v1179, %v1318
    %v1458 = vsel %vm902, %v1180, %v1319
    %v1459 = vsel %vm903, %v1181, %v1320
    %v1460 = vsel %vm904, %v1182, %v1321
    %v1461 = vsel %vm905, %v1183, %v1322
    %v1462 = vsel %vm906, %v1184, %v1323
    %v1463 = vsel %vm907, %v1185, %v1324
    %v1464 = vsel %vm908, %v1186, %v1325
    %v1465 = vsel %vm909, %v1187, %v1326
    %v1466 = vsel %vm910, %v1188, %v1327
    %v1467 = vsel %vm911, %v1189, %v1328
    %v1468 = vsel %vm912, %v1190, %v1329
    %v1469 = vsel %vm913, %v1191, %v1330
    %v1470 = vsel %vm914, %v1192, %v1331
    %v1471 = vsel %vm915, %v1193, %v1332
    %v1472 = vsel %vm916, %v1194, %v1333
    %v1473 = vsel %vm917, %v1195, %v1334
    %v1474 = vsel %vm918, %v1196, %v1335
    %v1475 = vsel %vm919, %v1197, %v1336
    %v1476 = vsel %vm920, %v1198, %v1337
    %v1477 = vsel %vm921, %v1199, %v1338
    %v1478 = vsel %vm922, %v1200, %v1339
    %v1479 = vsel %vm923, %v1201, %v1340
    %v1480 = vsel %vm924, %v1202, %v1341
    %v1481 = vsel %vm925, %v1203, %v1342
    %v1482 = vsel %vm926, %v1204, %v1343
    %v1483 = vsel %vm927, %v1205, %v1344
    %v1484 = vsel %vm928, %v1206, %v1345
    %v1485 = vsel %vm929, %v1207, %v1346
    %v1486 = vsel %vm930, %v1208, %v1347
    %v1487 = vsel %vm931, %v1209, %v1348
    %v1488 = vsel %vm932, %v1210, %v1349
    %v1489 = vsel %vm933, %v1211, %v1350
    %v1490 = vsel %vm934, %v1212, %v1351
    %v1491 = vsel %vm935, %v1213, %v1352
    %v1492 = vsel %vm936, %v1214, %v1353
    %v1493 = vsel %vm937, %v1215, %v1354
    %v1494 = vsel %vm938, %v1216, %v1355
    %v1495 = vsel %vm939, %v1217, %v1356
    %v1496 = vsel %vm940, %v1218, %v1357
    %v1497 = vsel %vm941, %v1219, %v1358
    %v1498 = vsel %vm942, %v1220, %v1359
    %v1499 = vsel %vm943, %v1221, %v1360
    %v1500 = vsel %vm944, %v1222, %v1361
    %v1501 = vsel %vm945, %v1223, %v1362
    %v1502 = vsel %vm946, %v1224, %v1363
    %v1503 = vsel %vm947, %v1225, %v1364
    %v1504 = vsel %vm948, %v1226, %v1365
    %v1505 = vsel %vm949, %v1227, %v1366
    %v1506 = vsel %vm950, %v1228, %v1367
    %v1507 = vsel %vm951, %v1229, %v1368
    %v1508 = vsel %vm952, %v1230, %v1369
    %v1509 = vsel %vm953, %v1231, %v1370
    %v1510 = vsel %vm954, %v1232, %v1371
    %v1511 = vsel %vm955, %v1233, %v1372
    %v1512 = vsel %vm956, %v1234, %v1373
    %v1513 = vsel %vm957, %v1235, %v1374
    %v1514 = vsel %vm958, %v1236, %v1375
    %v1515 = vsel %vm959, %v1237, %v1376
    %v1516 = vsel %vm960, %v1238, %v1377
    %v1517 = vsel %vm961, %v1239, %v1378
    %v1518 = vsel %vm962, %v1240, %v1379
    %v1519 = vsel %vm963, %v1241, %v1380
    %v1520 = vsel %vm964, %v1242, %v1381
    %v1521 = vsel %vm965, %v1243, %v1382
    %v1522 = vsel %vm966, %v1244, %v1383
    %v1523 = vsel %vm967, %v1245, %v1384
    %v1524 = vsel %vm968, %v1246, %v1385
    %v1525 = vsel %vm969, %v1247, %v1386
    %v1526 = vsel %vm970, %v1248, %v1387
    %v1527 = vsel %vm971, %v1249, %v1388
    %v1528 = vsel %vm972, %v1250, %v1389
    %v1529 = vsel %vm973, %v1251, %v1390
    %v1530 = vsel %vm974, %v1252, %v1391
    %v1531 = vsel %vm975, %v1253, %v1392
    %v1532 = vsel %vm976, %v1254, %v1393
    %v1533 = vsel %vm977, %v1255, %v1394
    %v1534 = vsel %vm978, %v1256, %v1395
    %v1535 = vsel %vm979, %v1257, %v1396
    %v1536 = vsel %vm980, %v1258, %v1397
    %v1537 = vsel %vm981, %v1259, %v1398
    %v1538 = vsel %vm982, %v1260, %v1399
    %v1539 = vsel %vm983, %v1261, %v1400
    %v1540 = vsel %vm984, %v1262, %v1401
    %v1541 = vsel %vm985, %v1263, %v1402
    %v1542 = vsel %vm986, %v1264, %v1403
    %v1543 = vsel %vm987, %v1265, %v1404
    %v1544 = vsel %vm988, %v1266, %v1405
    %v1545 = vsel %vm989, %v1267, %v1406
    %v1546 = vsel %vm990, %v1268, %v1407
    %v1547 = vsel %vm991, %v1269, %v1408
    %v1548 = vsel %vm992, %v1270, %v1409
    %v1549 = vsel %vm993, %v1271, %v1410
    %v1550 = vsel %vm994, %v1272, %v1411
    %v1551 = vsel %vm995, %v1273, %v1412
    %v1552 = vsel %vm996, %v1274, %v1413
    %v1553 = vsel %vm997, %v1275, %v1414
    %v1554 = vsel %vm998, %v1276, %v1415
    %v1555 = vsel %vm999, %v1277, %v1416
    %v1556 = vsel %vm1000, %v1278, %v1417
    %v1557 = vsel %vm1001, %v1279, %v1418
    %v1558 = vsel %vm1002, %v1280, %v1419
    %v1559 = vsel %vm1003, %v1281, %v1420
    %v1560 = vsel %vm1004, %v1282, %v1421
    %v1561 = vsel %vm1005, %v1283, %v1422
    %v1562 = vsel %vm1006, %v1284, %v1423
    %v1563 = vsel %vm1007, %v1285, %v1424
    %v1564 = vsel %vm1008, %v1286, %v1425
    %v1565 = vsel %vm1009, %v1287, %v1426
    %v1566 = vsel %vm1010, %v1288, %v1427
    %v1567 = vsel %vm1011, %v1289, %v1428
    %v1568 = vsel %vm1012, %v1290, %v1429
    %v1569 = vsel %vm1013, %v1291, %v1430
    %v1570 = vsel %vm1014, %v1292, %v1431
    %v1571 = vsel %vm1015, %v1293, %v1432
    %v1572 = vsel %vm1016, %v1294, %v1433
    %s1573 = smul.u32 0, 1112
    %v1574 = vlaneseq
    %v1575 = vshrl.u32 %v1574, 7
    %v1576 = vadd.s32 %v1575, 8
    %v1577 = vadd.s32 %v1575, 16
    %v1578 = vadd.s32 %v1575, 24
    %v1579 = vadd.s32 %v1575, 32
    %v1580 = vadd.s32 %v1575, 40
    %v1581 = vadd.s32 %v1575, 48
    %v1582 = vadd.s32 %v1575, 56
    %v1583 = vadd.s32 %v1575, 64
    %v1584 = vadd.s32 %v1575, 72
    %v1585 = vadd.s32 %v1575, 80
    %v1586 = vadd.s32 %v1575, 88
    %v1587 = vadd.s32 %v1575, 96
    %v1588 = vadd.s32 %v1575, 104
    %v1589 = vadd.s32 %v1575, 112
    %v1590 = vadd.s32 %v1575, 120
    %v1591 = vadd.s32 %v1575, 128
    %v1592 = vadd.s32 %v1575, 136
    %v1593 = vadd.s32 %v1575, 144
    %v1594 = vadd.s32 %v1575, 152
    %v1595 = vadd.s32 %v1575, 160
    %v1596 = vadd.s32 %v1575, 168
    %v1597 = vadd.s32 %v1575, 176
    %v1598 = vadd.s32 %v1575, 184
    %v1599 = vadd.s32 %v1575, 192
    %v1600 = vadd.s32 %v1575, 200
    %v1601 = vadd.s32 %v1575, 208
    %v1602 = vadd.s32 %v1575, 216
    %v1603 = vadd.s32 %v1575, 224
    %v1604 = vadd.s32 %v1575, 232
    %v1605 = vadd.s32 %v1575, 240
    %v1606 = vadd.s32 %v1575, 248
    %v1607 = vadd.s32 %v1575, 256
    %v1608 = vadd.s32 %v1575, 264
    %v1609 = vadd.s32 %v1575, 272
    %v1610 = vadd.s32 %v1575, 280
    %v1611 = vadd.s32 %v1575, 288
    %v1612 = vadd.s32 %v1575, 296
    %v1613 = vadd.s32 %v1575, 304
    %v1614 = vadd.s32 %v1575, 312
    %v1615 = vadd.s32 %v1575, 320
    %v1616 = vadd.s32 %v1575, 328
    %v1617 = vadd.s32 %v1575, 336
    %v1618 = vadd.s32 %v1575, 344
    %v1619 = vadd.s32 %v1575, 352
    %v1620 = vadd.s32 %v1575, 360
    %v1621 = vadd.s32 %v1575, 368
    %v1622 = vadd.s32 %v1575, 376
    %v1623 = vadd.s32 %v1575, 384
    %v1624 = vadd.s32 %v1575, 392
    %v1625 = vadd.s32 %v1575, 400
    %v1626 = vadd.s32 %v1575, 408
    %v1627 = vadd.s32 %v1575, 416
    %v1628 = vadd.s32 %v1575, 424
    %v1629 = vadd.s32 %v1575, 432
    %v1630 = vadd.s32 %v1575, 440
    %v1631 = vadd.s32 %v1575, 448
    %v1632 = vadd.s32 %v1575, 456
    %v1633 = vadd.s32 %v1575, 464
    %v1634 = vadd.s32 %v1575, 472
    %v1635 = vadd.s32 %v1575, 480
    %v1636 = vadd.s32 %v1575, 488
    %v1637 = vadd.s32 %v1575, 496
    %v1638 = vadd.s32 %v1575, 504
    %v1639 = vadd.s32 %v1575, 512
    %v1640 = vadd.s32 %v1575, 520
    %v1641 = vadd.s32 %v1575, 528
    %v1642 = vadd.s32 %v1575, 536
    %v1643 = vadd.s32 %v1575, 544
    %v1644 = vadd.s32 %v1575, 552
    %v1645 = vadd.s32 %v1575, 560
    %v1646 = vadd.s32 %v1575, 568
    %v1647 = vadd.s32 %v1575, 576
    %v1648 = vadd.s32 %v1575, 584
    %v1649 = vadd.s32 %v1575, 592
    %v1650 = vadd.s32 %v1575, 600
    %v1651 = vadd.s32 %v1575, 608
    %v1652 = vadd.s32 %v1575, 616
    %v1653 = vadd.s32 %v1575, 624
    %v1654 = vadd.s32 %v1575, 632
    %v1655 = vadd.s32 %v1575, 640
    %v1656 = vadd.s32 %v1575, 648
    %v1657 = vadd.s32 %v1575, 656
    %v1658 = vadd.s32 %v1575, 664
    %v1659 = vadd.s32 %v1575, 672
    %v1660 = vadd.s32 %v1575, 680
    %v1661 = vadd.s32 %v1575, 688
    %v1662 = vadd.s32 %v1575, 696
    %v1663 = vadd.s32 %v1575, 704
    %v1664 = vadd.s32 %v1575, 712
    %v1665 = vadd.s32 %v1575, 720
    %v1666 = vadd.s32 %v1575, 728
    %v1667 = vadd.s32 %v1575, 736
    %v1668 = vadd.s32 %v1575, 744
    %v1669 = vadd.s32 %v1575, 752
    %v1670 = vadd.s32 %v1575, 760
    %v1671 = vadd.s32 %v1575, 768
    %v1672 = vadd.s32 %v1575, 776
    %v1673 = vadd.s32 %v1575, 784
    %v1674 = vadd.s32 %v1575, 792
    %v1675 = vadd.s32 %v1575, 800
    %v1676 = vadd.s32 %v1575, 808
    %v1677 = vadd.s32 %v1575, 816
    %v1678 = vadd.s32 %v1575, 824
    %v1679 = vadd.s32 %v1575, 832
    %v1680 = vadd.s32 %v1575, 840
    %v1681 = vadd.s32 %v1575, 848
    %v1682 = vadd.s32 %v1575, 856
    %v1683 = vadd.s32 %v1575, 864
    %v1684 = vadd.s32 %v1575, 872
    %v1685 = vadd.s32 %v1575, 880
    %v1686 = vadd.s32 %v1575, 888
    %v1687 = vadd.s32 %v1575, 896
    %v1688 = vadd.s32 %v1575, 904
    %v1689 = vadd.s32 %v1575, 912
    %v1690 = vadd.s32 %v1575, 920
    %v1691 = vadd.s32 %v1575, 928
    %v1692 = vadd.s32 %v1575, 936
    %v1693 = vadd.s32 %v1575, 944
    %v1694 = vadd.s32 %v1575, 952
    %v1695 = vadd.s32 %v1575, 960
    %v1696 = vadd.s32 %v1575, 968
    %v1697 = vadd.s32 %v1575, 976
    %v1698 = vadd.s32 %v1575, 984
    %v1699 = vadd.s32 %v1575, 992
    %v1700 = vadd.s32 %v1575, 1000
    %v1701 = vadd.s32 %v1575, 1008
    %v1702 = vadd.s32 %v1575, 1016
    %v1703 = vadd.s32 %v1575, 1024
    %v1704 = vadd.s32 %v1575, 1032
    %v1705 = vadd.s32 %v1575, 1040
    %v1706 = vadd.s32 %v1575, 1048
    %v1707 = vadd.s32 %v1575, 1056
    %v1708 = vadd.s32 %v1575, 1064
    %v1709 = vadd.s32 %v1575, 1072
    %v1710 = vadd.s32 %v1575, 1080
    %v1711 = vadd.s32 %v1575, 1088
    %v1712 = vadd.s32 %v1575, 1096
    %v1713 = vadd.s32 %v1575, 1104
    %v1714 = vstv %s1573
    %v1715 = vadd.s32 %v1714, %v1575
    %v1716 = vadd.s32 %v1714, %v1576
    %v1717 = vadd.s32 %v1714, %v1577
    %v1718 = vadd.s32 %v1714, %v1578
    %v1719 = vadd.s32 %v1714, %v1579
    %v1720 = vadd.s32 %v1714, %v1580
    %v1721 = vadd.s32 %v1714, %v1581
    %v1722 = vadd.s32 %v1714, %v1582
    %v1723 = vadd.s32 %v1714, %v1583
    %v1724 = vadd.s32 %v1714, %v1584
    %v1725 = vadd.s32 %v1714, %v1585
    %v1726 = vadd.s32 %v1714, %v1586
    %v1727 = vadd.s32 %v1714, %v1587
    %v1728 = vadd.s32 %v1714, %v1588
    %v1729 = vadd.s32 %v1714, %v1589
    %v1730 = vadd.s32 %v1714, %v1590
    %v1731 = vadd.s32 %v1714, %v1591
    %v1732 = vadd.s32 %v1714, %v1592
    %v1733 = vadd.s32 %v1714, %v1593
    %v1734 = vadd.s32 %v1714, %v1594
    %v1735 = vadd.s32 %v1714, %v1595
    %v1736 = vadd.s32 %v1714, %v1596
    %v1737 = vadd.s32 %v1714, %v1597
    %v1738 = vadd.s32 %v1714, %v1598
    %v1739 = vadd.s32 %v1714, %v1599
    %v1740 = vadd.s32 %v1714, %v1600
    %v1741 = vadd.s32 %v1714, %v1601
    %v1742 = vadd.s32 %v1714, %v1602
    %v1743 = vadd.s32 %v1714, %v1603
    %v1744 = vadd.s32 %v1714, %v1604
    %v1745 = vadd.s32 %v1714, %v1605
    %v1746 = vadd.s32 %v1714, %v1606
    %v1747 = vadd.s32 %v1714, %v1607
    %v1748 = vadd.s32 %v1714, %v1608
    %v1749 = vadd.s32 %v1714, %v1609
    %v1750 = vadd.s32 %v1714, %v1610
    %v1751 = vadd.s32 %v1714, %v1611
    %v1752 = vadd.s32 %v1714, %v1612
    %v1753 = vadd.s32 %v1714, %v1613
    %v1754 = vadd.s32 %v1714, %v1614
    %v1755 = vadd.s32 %v1714, %v1615
    %v1756 = vadd.s32 %v1714, %v1616
    %v1757 = vadd.s32 %v1714, %v1617
    %v1758 = vadd.s32 %v1714, %v1618
    %v1759 = vadd.s32 %v1714, %v1619
    %v1760 = vadd.s32 %v1714, %v1620
    %v1761 = vadd.s32 %v1714, %v1621
    %v1762 = vadd.s32 %v1714, %v1622
    %v1763 = vadd.s32 %v1714, %v1623
    %v1764 = vadd.s32 %v1714, %v1624
    %v1765 = vadd.s32 %v1714, %v1625
    %v1766 = vadd.s32 %v1714, %v1626
    %v1767 = vadd.s32 %v1714, %v1627
    %v1768 = vadd.s32 %v1714, %v1628
    %v1769 = vadd.s32 %v1714, %v1629
    %v1770 = vadd.s32 %v1714, %v1630
    %v1771 = vadd.s32 %v1714, %v1631
    %v1772 = vadd.s32 %v1714, %v1632
    %v1773 = vadd.s32 %v1714, %v1633
    %v1774 = vadd.s32 %v1714, %v1634
    %v1775 = vadd.s32 %v1714, %v1635
    %v1776 = vadd.s32 %v1714, %v1636
    %v1777 = vadd.s32 %v1714, %v1637
    %v1778 = vadd.s32 %v1714, %v1638
    %v1779 = vadd.s32 %v1714, %v1639
    %v1780 = vadd.s32 %v1714, %v1640
    %v1781 = vadd.s32 %v1714, %v1641
    %v1782 = vadd.s32 %v1714, %v1642
    %v1783 = vadd.s32 %v1714, %v1643
    %v1784 = vadd.s32 %v1714, %v1644
    %v1785 = vadd.s32 %v1714, %v1645
    %v1786 = vadd.s32 %v1714, %v1646
    %v1787 = vadd.s32 %v1714, %v1647
    %v1788 = vadd.s32 %v1714, %v1648
    %v1789 = vadd.s32 %v1714, %v1649
    %v1790 = vadd.s32 %v1714, %v1650
    %v1791 = vadd.s32 %v1714, %v1651
    %v1792 = vadd.s32 %v1714, %v1652
    %v1793 = vadd.s32 %v1714, %v1653
    %v1794 = vadd.s32 %v1714, %v1654
    %v1795 = vadd.s32 %v1714, %v1655
    %v1796 = vadd.s32 %v1714, %v1656
    %v1797 = vadd.s32 %v1714, %v1657
    %v1798 = vadd.s32 %v1714, %v1658
    %v1799 = vadd.s32 %v1714, %v1659
    %v1800 = vadd.s32 %v1714, %v1660
    %v1801 = vadd.s32 %v1714, %v1661
    %v1802 = vadd.s32 %v1714, %v1662
    %v1803 = vadd.s32 %v1714, %v1663
    %v1804 = vadd.s32 %v1714, %v1664
    %v1805 = vadd.s32 %v1714, %v1665
    %v1806 = vadd.s32 %v1714, %v1666
    %v1807 = vadd.s32 %v1714, %v1667
    %v1808 = vadd.s32 %v1714, %v1668
    %v1809 = vadd.s32 %v1714, %v1669
    %v1810 = vadd.s32 %v1714, %v1670
    %v1811 = vadd.s32 %v1714, %v1671
    %v1812 = vadd.s32 %v1714, %v1672
    %v1813 = vadd.s32 %v1714, %v1673
    %v1814 = vadd.s32 %v1714, %v1674
    %v1815 = vadd.s32 %v1714, %v1675
    %v1816 = vadd.s32 %v1714, %v1676
    %v1817 = vadd.s32 %v1714, %v1677
    %v1818 = vadd.s32 %v1714, %v1678
    %v1819 = vadd.s32 %v1714, %v1679
    %v1820 = vadd.s32 %v1714, %v1680
    %v1821 = vadd.s32 %v1714, %v1681
    %v1822 = vadd.s32 %v1714, %v1682
    %v1823 = vadd.s32 %v1714, %v1683
    %v1824 = vadd.s32 %v1714, %v1684
    %v1825 = vadd.s32 %v1714, %v1685
    %v1826 = vadd.s32 %v1714, %v1686
    %v1827 = vadd.s32 %v1714, %v1687
    %v1828 = vadd.s32 %v1714, %v1688
    %v1829 = vadd.s32 %v1714, %v1689
    %v1830 = vadd.s32 %v1714, %v1690
    %v1831 = vadd.s32 %v1714, %v1691
    %v1832 = vadd.s32 %v1714, %v1692
    %v1833 = vadd.s32 %v1714, %v1693
    %v1834 = vadd.s32 %v1714, %v1694
    %v1835 = vadd.s32 %v1714, %v1695
    %v1836 = vadd.s32 %v1714, %v1696
    %v1837 = vadd.s32 %v1714, %v1697
    %v1838 = vadd.s32 %v1714, %v1698
    %v1839 = vadd.s32 %v1714, %v1699
    %v1840 = vadd.s32 %v1714, %v1700
    %v1841 = vadd.s32 %v1714, %v1701
    %v1842 = vadd.s32 %v1714, %v1702
    %v1843 = vadd.s32 %v1714, %v1703
    %v1844 = vadd.s32 %v1714, %v1704
    %v1845 = vadd.s32 %v1714, %v1705
    %v1846 = vadd.s32 %v1714, %v1706
    %v1847 = vadd.s32 %v1714, %v1707
    %v1848 = vadd.s32 %v1714, %v1708
    %v1849 = vadd.s32 %v1714, %v1709
    %v1850 = vadd.s32 %v1714, %v1710
    %v1851 = vadd.s32 %v1714, %v1711
    %v1852 = vadd.s32 %v1714, %v1712
    %v1853 = vadd.s32 %v1714, %v1713
    %vm1854 = vcmp.lt.s32.totalorder %v1715, 1105
    %vm1855 = vcmp.lt.s32.totalorder %v1716, 1105
    %vm1856 = vcmp.lt.s32.totalorder %v1717, 1105
    %vm1857 = vcmp.lt.s32.totalorder %v1718, 1105
    %vm1858 = vcmp.lt.s32.totalorder %v1719, 1105
    %vm1859 = vcmp.lt.s32.totalorder %v1720, 1105
    %vm1860 = vcmp.lt.s32.totalorder %v1721, 1105
    %vm1861 = vcmp.lt.s32.totalorder %v1722, 1105
    %vm1862 = vcmp.lt.s32.totalorder %v1723, 1105
    %vm1863 = vcmp.lt.s32.totalorder %v1724, 1105
    %vm1864 = vcmp.lt.s32.totalorder %v1725, 1105
    %vm1865 = vcmp.lt.s32.totalorder %v1726, 1105
    %vm1866 = vcmp.lt.s32.totalorder %v1727, 1105
    %vm1867 = vcmp.lt.s32.totalorder %v1728, 1105
    %vm1868 = vcmp.lt.s32.totalorder %v1729, 1105
    %vm1869 = vcmp.lt.s32.totalorder %v1730, 1105
    %vm1870 = vcmp.lt.s32.totalorder %v1731, 1105
    %vm1871 = vcmp.lt.s32.totalorder %v1732, 1105
    %vm1872 = vcmp.lt.s32.totalorder %v1733, 1105
    %vm1873 = vcmp.lt.s32.totalorder %v1734, 1105
    %vm1874 = vcmp.lt.s32.totalorder %v1735, 1105
    %vm1875 = vcmp.lt.s32.totalorder %v1736, 1105
    %vm1876 = vcmp.lt.s32.totalorder %v1737, 1105
    %vm1877 = vcmp.lt.s32.totalorder %v1738, 1105
    %vm1878 = vcmp.lt.s32.totalorder %v1739, 1105
    %vm1879 = vcmp.lt.s32.totalorder %v1740, 1105
    %vm1880 = vcmp.lt.s32.totalorder %v1741, 1105
    %vm1881 = vcmp.lt.s32.totalorder %v1742, 1105
    %vm1882 = vcmp.lt.s32.totalorder %v1743, 1105
    %vm1883 = vcmp.lt.s32.totalorder %v1744, 1105
    %vm1884 = vcmp.lt.s32.totalorder %v1745, 1105
    %vm1885 = vcmp.lt.s32.totalorder %v1746, 1105
    %vm1886 = vcmp.lt.s32.totalorder %v1747, 1105
    %vm1887 = vcmp.lt.s32.totalorder %v1748, 1105
    %vm1888 = vcmp.lt.s32.totalorder %v1749, 1105
    %vm1889 = vcmp.lt.s32.totalorder %v1750, 1105
    %vm1890 = vcmp.lt.s32.totalorder %v1751, 1105
    %vm1891 = vcmp.lt.s32.totalorder %v1752, 1105
    %vm1892 = vcmp.lt.s32.totalorder %v1753, 1105
    %vm1893 = vcmp.lt.s32.totalorder %v1754, 1105
    %vm1894 = vcmp.lt.s32.totalorder %v1755, 1105
    %vm1895 = vcmp.lt.s32.totalorder %v1756, 1105
    %vm1896 = vcmp.lt.s32.totalorder %v1757, 1105
    %vm1897 = vcmp.lt.s32.totalorder %v1758, 1105
    %vm1898 = vcmp.lt.s32.totalorder %v1759, 1105
    %vm1899 = vcmp.lt.s32.totalorder %v1760, 1105
    %vm1900 = vcmp.lt.s32.totalorder %v1761, 1105
    %vm1901 = vcmp.lt.s32.totalorder %v1762, 1105
    %vm1902 = vcmp.lt.s32.totalorder %v1763, 1105
    %vm1903 = vcmp.lt.s32.totalorder %v1764, 1105
    %vm1904 = vcmp.lt.s32.totalorder %v1765, 1105
    %vm1905 = vcmp.lt.s32.totalorder %v1766, 1105
    %vm1906 = vcmp.lt.s32.totalorder %v1767, 1105
    %vm1907 = vcmp.lt.s32.totalorder %v1768, 1105
    %vm1908 = vcmp.lt.s32.totalorder %v1769, 1105
    %vm1909 = vcmp.lt.s32.totalorder %v1770, 1105
    %vm1910 = vcmp.lt.s32.totalorder %v1771, 1105
    %vm1911 = vcmp.lt.s32.totalorder %v1772, 1105
    %vm1912 = vcmp.lt.s32.totalorder %v1773, 1105
    %vm1913 = vcmp.lt.s32.totalorder %v1774, 1105
    %vm1914 = vcmp.lt.s32.totalorder %v1775, 1105
    %vm1915 = vcmp.lt.s32.totalorder %v1776, 1105
    %vm1916 = vcmp.lt.s32.totalorder %v1777, 1105
    %vm1917 = vcmp.lt.s32.totalorder %v1778, 1105
    %vm1918 = vcmp.lt.s32.totalorder %v1779, 1105
    %vm1919 = vcmp.lt.s32.totalorder %v1780, 1105
    %vm1920 = vcmp.lt.s32.totalorder %v1781, 1105
    %vm1921 = vcmp.lt.s32.totalorder %v1782, 1105
    %vm1922 = vcmp.lt.s32.totalorder %v1783, 1105
    %vm1923 = vcmp.lt.s32.totalorder %v1784, 1105
    %vm1924 = vcmp.lt.s32.totalorder %v1785, 1105
    %vm1925 = vcmp.lt.s32.totalorder %v1786, 1105
    %vm1926 = vcmp.lt.s32.totalorder %v1787, 1105
    %vm1927 = vcmp.lt.s32.totalorder %v1788, 1105
    %vm1928 = vcmp.lt.s32.totalorder %v1789, 1105
    %vm1929 = vcmp.lt.s32.totalorder %v1790, 1105
    %vm1930 = vcmp.lt.s32.totalorder %v1791, 1105
    %vm1931 = vcmp.lt.s32.totalorder %v1792, 1105
    %vm1932 = vcmp.lt.s32.totalorder %v1793, 1105
    %vm1933 = vcmp.lt.s32.totalorder %v1794, 1105
    %vm1934 = vcmp.lt.s32.totalorder %v1795, 1105
    %vm1935 = vcmp.lt.s32.totalorder %v1796, 1105
    %vm1936 = vcmp.lt.s32.totalorder %v1797, 1105
    %vm1937 = vcmp.lt.s32.totalorder %v1798, 1105
    %vm1938 = vcmp.lt.s32.totalorder %v1799, 1105
    %vm1939 = vcmp.lt.s32.totalorder %v1800, 1105
    %vm1940 = vcmp.lt.s32.totalorder %v1801, 1105
    %vm1941 = vcmp.lt.s32.totalorder %v1802, 1105
    %vm1942 = vcmp.lt.s32.totalorder %v1803, 1105
    %vm1943 = vcmp.lt.s32.totalorder %v1804, 1105
    %vm1944 = vcmp.lt.s32.totalorder %v1805, 1105
    %vm1945 = vcmp.lt.s32.totalorder %v1806, 1105
    %vm1946 = vcmp.lt.s32.totalorder %v1807, 1105
    %vm1947 = vcmp.lt.s32.totalorder %v1808, 1105
    %vm1948 = vcmp.lt.s32.totalorder %v1809, 1105
    %vm1949 = vcmp.lt.s32.totalorder %v1810, 1105
    %vm1950 = vcmp.lt.s32.totalorder %v1811, 1105
    %vm1951 = vcmp.lt.s32.totalorder %v1812, 1105
    %vm1952 = vcmp.lt.s32.totalorder %v1813, 1105
    %vm1953 = vcmp.lt.s32.totalorder %v1814, 1105
    %vm1954 = vcmp.lt.s32.totalorder %v1815, 1105
    %vm1955 = vcmp.lt.s32.totalorder %v1816, 1105
    %vm1956 = vcmp.lt.s32.totalorder %v1817, 1105
    %vm1957 = vcmp.lt.s32.totalorder %v1818, 1105
    %vm1958 = vcmp.lt.s32.totalorder %v1819, 1105
    %vm1959 = vcmp.lt.s32.totalorder %v1820, 1105
    %vm1960 = vcmp.lt.s32.totalorder %v1821, 1105
    %vm1961 = vcmp.lt.s32.totalorder %v1822, 1105
    %vm1962 = vcmp.lt.s32.totalorder %v1823, 1105
    %vm1963 = vcmp.lt.s32.totalorder %v1824, 1105
    %vm1964 = vcmp.lt.s32.totalorder %v1825, 1105
    %vm1965 = vcmp.lt.s32.totalorder %v1826, 1105
    %vm1966 = vcmp.lt.s32.totalorder %v1827, 1105
    %vm1967 = vcmp.lt.s32.totalorder %v1828, 1105
    %vm1968 = vcmp.lt.s32.totalorder %v1829, 1105
    %vm1969 = vcmp.lt.s32.totalorder %v1830, 1105
    %vm1970 = vcmp.lt.s32.totalorder %v1831, 1105
    %vm1971 = vcmp.lt.s32.totalorder %v1832, 1105
    %vm1972 = vcmp.lt.s32.totalorder %v1833, 1105
    %vm1973 = vcmp.lt.s32.totalorder %v1834, 1105
    %vm1974 = vcmp.lt.s32.totalorder %v1835, 1105
    %vm1975 = vcmp.lt.s32.totalorder %v1836, 1105
    %vm1976 = vcmp.lt.s32.totalorder %v1837, 1105
    %vm1977 = vcmp.lt.s32.totalorder %v1838, 1105
    %vm1978 = vcmp.lt.s32.totalorder %v1839, 1105
    %vm1979 = vcmp.lt.s32.totalorder %v1840, 1105
    %vm1980 = vcmp.lt.s32.totalorder %v1841, 1105
    %vm1981 = vcmp.lt.s32.totalorder %v1842, 1105
    %vm1982 = vcmp.lt.s32.totalorder %v1843, 1105
    %vm1983 = vcmp.lt.s32.totalorder %v1844, 1105
    %vm1984 = vcmp.lt.s32.totalorder %v1845, 1105
    %vm1985 = vcmp.lt.s32.totalorder %v1846, 1105
    %vm1986 = vcmp.lt.s32.totalorder %v1847, 1105
    %vm1987 = vcmp.lt.s32.totalorder %v1848, 1105
    %vm1988 = vcmp.lt.s32.totalorder %v1849, 1105
    %vm1989 = vcmp.lt.s32.totalorder %v1850, 1105
    %vm1990 = vcmp.lt.s32.totalorder %v1851, 1105
    %vm1991 = vcmp.lt.s32.totalorder %v1852, 1105
    %vm1992 = vcmp.lt.s32.totalorder %v1853, 1105
    %v1993 = vsel %vm1854, %v1434, 0.0
    %v1994 = vsel %vm1855, %v1435, 0.0
    %v1995 = vsel %vm1856, %v1436, 0.0
    %v1996 = vsel %vm1857, %v1437, 0.0
    %v1997 = vsel %vm1858, %v1438, 0.0
    %v1998 = vsel %vm1859, %v1439, 0.0
    %v1999 = vsel %vm1860, %v1440, 0.0
    %v2000 = vsel %vm1861, %v1441, 0.0
    %v2001 = vsel %vm1862, %v1442, 0.0
    %v2002 = vsel %vm1863, %v1443, 0.0
    %v2003 = vsel %vm1864, %v1444, 0.0
    %v2004 = vsel %vm1865, %v1445, 0.0
    %v2005 = vsel %vm1866, %v1446, 0.0
    %v2006 = vsel %vm1867, %v1447, 0.0
    %v2007 = vsel %vm1868, %v1448, 0.0
    %v2008 = vsel %vm1869, %v1449, 0.0
    %v2009 = vsel %vm1870, %v1450, 0.0
    %v2010 = vsel %vm1871, %v1451, 0.0
    %v2011 = vsel %vm1872, %v1452, 0.0
    %v2012 = vsel %vm1873, %v1453, 0.0
    %v2013 = vsel %vm1874, %v1454, 0.0
    %v2014 = vsel %vm1875, %v1455, 0.0
    %v2015 = vsel %vm1876, %v1456, 0.0
    %v2016 = vsel %vm1877, %v1457, 0.0
    %v2017 = vsel %vm1878, %v1458, 0.0
    %v2018 = vsel %vm1879, %v1459, 0.0
    %v2019 = vsel %vm1880, %v1460, 0.0
    %v2020 = vsel %vm1881, %v1461, 0.0
    %v2021 = vsel %vm1882, %v1462, 0.0
    %v2022 = vsel %vm1883, %v1463, 0.0
    %v2023 = vsel %vm1884, %v1464, 0.0
    %v2024 = vsel %vm1885, %v1465, 0.0
    %v2025 = vsel %vm1886, %v1466, 0.0
    %v2026 = vsel %vm1887, %v1467, 0.0
    %v2027 = vsel %vm1888, %v1468, 0.0
    %v2028 = vsel %vm1889, %v1469, 0.0
    %v2029 = vsel %vm1890, %v1470, 0.0
    %v2030 = vsel %vm1891, %v1471, 0.0
    %v2031 = vsel %vm1892, %v1472, 0.0
    %v2032 = vsel %vm1893, %v1473, 0.0
    %v2033 = vsel %vm1894, %v1474, 0.0
    %v2034 = vsel %vm1895, %v1475, 0.0
    %v2035 = vsel %vm1896, %v1476, 0.0
    %v2036 = vsel %vm1897, %v1477, 0.0
    %v2037 = vsel %vm1898, %v1478, 0.0
    %v2038 = vsel %vm1899, %v1479, 0.0
    %v2039 = vsel %vm1900, %v1480, 0.0
    %v2040 = vsel %vm1901, %v1481, 0.0
    %v2041 = vsel %vm1902, %v1482, 0.0
    %v2042 = vsel %vm1903, %v1483, 0.0
    %v2043 = vsel %vm1904, %v1484, 0.0
    %v2044 = vsel %vm1905, %v1485, 0.0
    %v2045 = vsel %vm1906, %v1486, 0.0
    %v2046 = vsel %vm1907, %v1487, 0.0
    %v2047 = vsel %vm1908, %v1488, 0.0
    %v2048 = vsel %vm1909, %v1489, 0.0
    %v2049 = vsel %vm1910, %v1490, 0.0
    %v2050 = vsel %vm1911, %v1491, 0.0
    %v2051 = vsel %vm1912, %v1492, 0.0
    %v2052 = vsel %vm1913, %v1493, 0.0
    %v2053 = vsel %vm1914, %v1494, 0.0
    %v2054 = vsel %vm1915, %v1495, 0.0
    %v2055 = vsel %vm1916, %v1496, 0.0
    %v2056 = vsel %vm1917, %v1497, 0.0
    %v2057 = vsel %vm1918, %v1498, 0.0
    %v2058 = vsel %vm1919, %v1499, 0.0
    %v2059 = vsel %vm1920, %v1500, 0.0
    %v2060 = vsel %vm1921, %v1501, 0.0
    %v2061 = vsel %vm1922, %v1502, 0.0
    %v2062 = vsel %vm1923, %v1503, 0.0
    %v2063 = vsel %vm1924, %v1504, 0.0
    %v2064 = vsel %vm1925, %v1505, 0.0
    %v2065 = vsel %vm1926, %v1506, 0.0
    %v2066 = vsel %vm1927, %v1507, 0.0
    %v2067 = vsel %vm1928, %v1508, 0.0
    %v2068 = vsel %vm1929, %v1509, 0.0
    %v2069 = vsel %vm1930, %v1510, 0.0
    %v2070 = vsel %vm1931, %v1511, 0.0
    %v2071 = vsel %vm1932, %v1512, 0.0
    %v2072 = vsel %vm1933, %v1513, 0.0
    %v2073 = vsel %vm1934, %v1514, 0.0
    %v2074 = vsel %vm1935, %v1515, 0.0
    %v2075 = vsel %vm1936, %v1516, 0.0
    %v2076 = vsel %vm1937, %v1517, 0.0
    %v2077 = vsel %vm1938, %v1518, 0.0
    %v2078 = vsel %vm1939, %v1519, 0.0
    %v2079 = vsel %vm1940, %v1520, 0.0
    %v2080 = vsel %vm1941, %v1521, 0.0
    %v2081 = vsel %vm1942, %v1522, 0.0
    %v2082 = vsel %vm1943, %v1523, 0.0
    %v2083 = vsel %vm1944, %v1524, 0.0
    %v2084 = vsel %vm1945, %v1525, 0.0
    %v2085 = vsel %vm1946, %v1526, 0.0
    %v2086 = vsel %vm1947, %v1527, 0.0
    %v2087 = vsel %vm1948, %v1528, 0.0
    %v2088 = vsel %vm1949, %v1529, 0.0
    %v2089 = vsel %vm1950, %v1530, 0.0
    %v2090 = vsel %vm1951, %v1531, 0.0
    %v2091 = vsel %vm1952, %v1532, 0.0
    %v2092 = vsel %vm1953, %v1533, 0.0
    %v2093 = vsel %vm1954, %v1534, 0.0
    %v2094 = vsel %vm1955, %v1535, 0.0
    %v2095 = vsel %vm1956, %v1536, 0.0
    %v2096 = vsel %vm1957, %v1537, 0.0
    %v2097 = vsel %vm1958, %v1538, 0.0
    %v2098 = vsel %vm1959, %v1539, 0.0
    %v2099 = vsel %vm1960, %v1540, 0.0
    %v2100 = vsel %vm1961, %v1541, 0.0
    %v2101 = vsel %vm1962, %v1542, 0.0
    %v2102 = vsel %vm1963, %v1543, 0.0
    %v2103 = vsel %vm1964, %v1544, 0.0
    %v2104 = vsel %vm1965, %v1545, 0.0
    %v2105 = vsel %vm1966, %v1546, 0.0
    %v2106 = vsel %vm1967, %v1547, 0.0
    %v2107 = vsel %vm1968, %v1548, 0.0
    %v2108 = vsel %vm1969, %v1549, 0.0
    %v2109 = vsel %vm1970, %v1550, 0.0
    %v2110 = vsel %vm1971, %v1551, 0.0
    %v2111 = vsel %vm1972, %v1552, 0.0
    %v2112 = vsel %vm1973, %v1553, 0.0
    %v2113 = vsel %vm1974, %v1554, 0.0
    %v2114 = vsel %vm1975, %v1555, 0.0
    %v2115 = vsel %vm1976, %v1556, 0.0
    %v2116 = vsel %vm1977, %v1557, 0.0
    %v2117 = vsel %vm1978, %v1558, 0.0
    %v2118 = vsel %vm1979, %v1559, 0.0
    %v2119 = vsel %vm1980, %v1560, 0.0
    %v2120 = vsel %vm1981, %v1561, 0.0
    %v2121 = vsel %vm1982, %v1562, 0.0
    %v2122 = vsel %vm1983, %v1563, 0.0
    %v2123 = vsel %vm1984, %v1564, 0.0
    %v2124 = vsel %vm1985, %v1565, 0.0
    %v2125 = vsel %vm1986, %v1566, 0.0
    %v2126 = vsel %vm1987, %v1567, 0.0
    %v2127 = vsel %vm1988, %v1568, 0.0
    %v2128 = vsel %vm1989, %v1569, 0.0
    %v2129 = vsel %vm1990, %v1570, 0.0
    %v2130 = vsel %vm1991, %v1571, 0.0
    %v2131 = vsel %vm1992, %v1572, 0.0
    %v2132 = vadd.f32 %v1993, %v1994
    %v2133 = vadd.f32 %v2132, %v1995
    %v2134 = vadd.f32 %v2133, %v1996
    %v2135 = vadd.f32 %v2134, %v1997
    %v2136 = vadd.f32 %v2135, %v1998
    %v2137 = vadd.f32 %v2136, %v1999
    %v2138 = vadd.f32 %v2137, %v2000
    %v2139 = vadd.f32 %v2138, %v2001
    %v2140 = vadd.f32 %v2139, %v2002
    %v2141 = vadd.f32 %v2140, %v2003
    %v2142 = vadd.f32 %v2141, %v2004
    %v2143 = vadd.f32 %v2142, %v2005
    %v2144 = vadd.f32 %v2143, %v2006
    %v2145 = vadd.f32 %v2144, %v2007
    %v2146 = vadd.f32 %v2145, %v2008
    %v2147 = vadd.f32 %v2146, %v2009
    %v2148 = vadd.f32 %v2147, %v2010
    %v2149 = vadd.f32 %v2148, %v2011
    %v2150 = vadd.f32 %v2149, %v2012
    %v2151 = vadd.f32 %v2150, %v2013
    %v2152 = vadd.f32 %v2151, %v2014
    %v2153 = vadd.f32 %v2152, %v2015
    %v2154 = vadd.f32 %v2153, %v2016
    %v2155 = vadd.f32 %v2154, %v2017
    %v2156 = vadd.f32 %v2155, %v2018
    %v2157 = vadd.f32 %v2156, %v2019
    %v2158 = vadd.f32 %v2157, %v2020
    %v2159 = vadd.f32 %v2158, %v2021
    %v2160 = vadd.f32 %v2159, %v2022
    %v2161 = vadd.f32 %v2160, %v2023
    %v2162 = vadd.f32 %v2161, %v2024
    %v2163 = vadd.f32 %v2162, %v2025
    %v2164 = vadd.f32 %v2163, %v2026
    %v2165 = vadd.f32 %v2164, %v2027
    %v2166 = vadd.f32 %v2165, %v2028
    %v2167 = vadd.f32 %v2166, %v2029
    %v2168 = vadd.f32 %v2167, %v2030
    %v2169 = vadd.f32 %v2168, %v2031
    %v2170 = vadd.f32 %v2169, %v2032
    %v2171 = vadd.f32 %v2170, %v2033
    %v2172 = vadd.f32 %v2171, %v2034
    %v2173 = vadd.f32 %v2172, %v2035
    %v2174 = vadd.f32 %v2173, %v2036
    %v2175 = vadd.f32 %v2174, %v2037
    %v2176 = vadd.f32 %v2175, %v2038
    %v2177 = vadd.f32 %v2176, %v2039
    %v2178 = vadd.f32 %v2177, %v2040
    %v2179 = vadd.f32 %v2178, %v2041
    %v2180 = vadd.f32 %v2179, %v2042
    %v2181 = vadd.f32 %v2180, %v2043
    %v2182 = vadd.f32 %v2181, %v2044
    %v2183 = vadd.f32 %v2182, %v2045
    %v2184 = vadd.f32 %v2183, %v2046
    %v2185 = vadd.f32 %v2184, %v2047
    %v2186 = vadd.f32 %v2185, %v2048
    %v2187 = vadd.f32 %v2186, %v2049
    %v2188 = vadd.f32 %v2187, %v2050
    %v2189 = vadd.f32 %v2188, %v2051
    %v2190 = vadd.f32 %v2189, %v2052
    %v2191 = vadd.f32 %v2190, %v2053
    %v2192 = vadd.f32 %v2191, %v2054
    %v2193 = vadd.f32 %v2192, %v2055
    %v2194 = vadd.f32 %v2193, %v2056
    %v2195 = vadd.f32 %v2194, %v2057
    %v2196 = vadd.f32 %v2195, %v2058
    %v2197 = vadd.f32 %v2196, %v2059
    %v2198 = vadd.f32 %v2197, %v2060
    %v2199 = vadd.f32 %v2198, %v2061
    %v2200 = vadd.f32 %v2199, %v2062
    %v2201 = vadd.f32 %v2200, %v2063
    %v2202 = vadd.f32 %v2201, %v2064
    %v2203 = vadd.f32 %v2202, %v2065
    %v2204 = vadd.f32 %v2203, %v2066
    %v2205 = vadd.f32 %v2204, %v2067
    %v2206 = vadd.f32 %v2205, %v2068
    %v2207 = vadd.f32 %v2206, %v2069
    %v2208 = vadd.f32 %v2207, %v2070
    %v2209 = vadd.f32 %v2208, %v2071
    %v2210 = vadd.f32 %v2209, %v2072
    %v2211 = vadd.f32 %v2210, %v2073
    %v2212 = vadd.f32 %v2211, %v2074
    %v2213 = vadd.f32 %v2212, %v2075
    %v2214 = vadd.f32 %v2213, %v2076
    %v2215 = vadd.f32 %v2214, %v2077
    %v2216 = vadd.f32 %v2215, %v2078
    %v2217 = vadd.f32 %v2216, %v2079
    %v2218 = vadd.f32 %v2217, %v2080
    %v2219 = vadd.f32 %v2218, %v2081
    %v2220 = vadd.f32 %v2219, %v2082
    %v2221 = vadd.f32 %v2220, %v2083
    %v2222 = vadd.f32 %v2221, %v2084
    %v2223 = vadd.f32 %v2222, %v2085
    %v2224 = vadd.f32 %v2223, %v2086
    %v2225 = vadd.f32 %v2224, %v2087
    %v2226 = vadd.f32 %v2225, %v2088
    %v2227 = vadd.f32 %v2226, %v2089
    %v2228 = vadd.f32 %v2227, %v2090
    %v2229 = vadd.f32 %v2228, %v2091
    %v2230 = vadd.f32 %v2229, %v2092
    %v2231 = vadd.f32 %v2230, %v2093
    %v2232 = vadd.f32 %v2231, %v2094
    %v2233 = vadd.f32 %v2232, %v2095
    %v2234 = vadd.f32 %v2233, %v2096
    %v2235 = vadd.f32 %v2234, %v2097
    %v2236 = vadd.f32 %v2235, %v2098
    %v2237 = vadd.f32 %v2236, %v2099
    %v2238 = vadd.f32 %v2237, %v2100
    %v2239 = vadd.f32 %v2238, %v2101
    %v2240 = vadd.f32 %v2239, %v2102
    %v2241 = vadd.f32 %v2240, %v2103
    %v2242 = vadd.f32 %v2241, %v2104
    %v2243 = vadd.f32 %v2242, %v2105
    %v2244 = vadd.f32 %v2243, %v2106
    %v2245 = vadd.f32 %v2244, %v2107
    %v2246 = vadd.f32 %v2245, %v2108
    %v2247 = vadd.f32 %v2246, %v2109
    %v2248 = vadd.f32 %v2247, %v2110
    %v2249 = vadd.f32 %v2248, %v2111
    %v2250 = vadd.f32 %v2249, %v2112
    %v2251 = vadd.f32 %v2250, %v2113
    %v2252 = vadd.f32 %v2251, %v2114
    %v2253 = vadd.f32 %v2252, %v2115
    %v2254 = vadd.f32 %v2253, %v2116
    %v2255 = vadd.f32 %v2254, %v2117
    %v2256 = vadd.f32 %v2255, %v2118
    %v2257 = vadd.f32 %v2256, %v2119
    %v2258 = vadd.f32 %v2257, %v2120
    %v2259 = vadd.f32 %v2258, %v2121
    %v2260 = vadd.f32 %v2259, %v2122
    %v2261 = vadd.f32 %v2260, %v2123
    %v2262 = vadd.f32 %v2261, %v2124
    %v2263 = vadd.f32 %v2262, %v2125
    %v2264 = vadd.f32 %v2263, %v2126
    %v2265 = vadd.f32 %v2264, %v2127
    %v2266 = vadd.f32 %v2265, %v2128
    %v2267 = vadd.f32 %v2266, %v2129
    %v2268 = vadd.f32 %v2267, %v2130
    %v2269 = vadd.f32 %v2268, %v2131
    %2270 = vst [vmem:[#allocation7] sm:$0xff] %v2269
    // Predicated region
    $region18: #{tpu_custom_call.1} parent=1 // pred_check
      _
    $region19: #{tpu_custom_call.1} parent=1 // pred_check_branch
      %2272 = sbr.rel (0) target = $region21
    $region20: #{tpu_custom_call.1} parent=1 // pred_region
      %2274 = vsyncadd [#allocation4], 0
      %s2276 = sshll.u32 [#allocation7], 4
      %s2277 = int_to_ptr.vmem [resolvable:$true] %s2276
      %s2278 = sshll.u32 %s2, 4
      %s2279 = int_to_ptr.hbm [resolvable:$true] %s2278
      %2281 = dma.vmem_to_hbm [thread:$0]  %s2277, 128, %s2279, [#allocation4]
    $region21: #{tpu_custom_call.1} parent=1 // pred_fallthru
      _
    // Predicated region
    $region22: #{tpu_custom_call.1} parent=1 // pred_check
      _
    $region23: #{tpu_custom_call.1} parent=1 // pred_check_branch
      %2283 = sbr.rel (0) target = $region25
    $region24: #{tpu_custom_call.1} parent=1 // pred_region
      %2285 = dma.done [#allocation4], 128
    $region25: #{tpu_custom_call.1} parent=1 // pred_fallthru
      _
    %2286 = vsyncpa [#allocation3], 1
    %2287 = vsyncpa [#allocation6], 1
    %2288 = vsyncpa [#allocation4], 1

</llo_original>
